<compile_context>
chip_gen: v5e
topology: v5e:2x2
jax: 0.10.0
libtpu: 0.0.40
codegen_flags: <defaults>
</compile_context>

<pallas_src>
import functools

import jax
import jax.numpy as jnp
from jax import lax
from jax.experimental import pallas as pl
from jax.experimental.pallas import tpu as pltpu


# --------------------------------------------------------------------------
# Kernels
# --------------------------------------------------------------------------

def t1_kernel(x_ref, w_ref, b_ref, h_ref):
    """h = relu(x @ W1 + b1) for one row tile (bf16 MXU inputs, f32 accumulate).

    x/W1 are pre-cast to bf16 in the wrapper (no per-grid-step casts here).
    """
    h = jnp.dot(x_ref[...], w_ref[...], preferred_element_type=jnp.float32) + b_ref[...]
    h_ref[...] = jnp.maximum(h, 0.0)


def falayer_kernel(adj_ref, hsrc_ref, sdst_ref, ssrc_ref, b_ref, raw_ref, out_ref,
                   *, eps, gate_dtype, compute_dtype):
    """One (row-tile, column-block) step of an FALayer.

    adj_ref  : (tile_n, tile_k) bf16, adj[i,j]*d_i*d_j (degree scaling hoisted)
    hsrc_ref : (tile_k, Hp)     bf16, source-node features (cast once per layer)
    sdst_ref : (tile_n, 1)      f32,  h_i . w_dst  (hoisted out of the kernel)
    ssrc_ref : (1, tile_k)      f32,  h_j . w_src  (hoisted out of the kernel)
    raw_ref  : (tile_n, Hp)     f32,  post-t1 features (constant over k)
    out_ref  : (tile_n, Hp)     f32,  doubles as the accumulator across k.
    """
    k = pl.program_id(1)

    @pl.when(k == 0)
    def _():
        out_ref[...] = eps * raw_ref[...]

    # Gate g[i,j] = tanh(s_dst_i + s_src_j + b).  tanh in bf16 on v6e/v7x
    # (EUP bf16 path ~2x throughput), f32 on v5e.
    pre = sdst_ref[...] + ssrc_ref[...] + b_ref[...]                # (tile_n, tile_k) f32
    gate = jnp.tanh(pre.astype(gate_dtype))

    # e[i,j] = adj_scaled[i,j] * g[i,j]; aggregation on the MXU (bf16 in, f32 acc).
    emat = adj_ref[...] * gate.astype(compute_dtype)
    out_ref[...] += jnp.dot(emat, hsrc_ref[...], preferred_element_type=jnp.float32)


def t2_kernel(h_ref, w_ref, b_ref, out_ref, *, out_dim):
    """logits = h @ W2 + b2 on a lane-dense (padded-to-128) slab + masked log_softmax."""
    logits = jnp.dot(h_ref[...], w_ref[...], preferred_element_type=jnp.float32) + b_ref[...]
    col = lax.broadcasted_iota(jnp.int32, logits.shape, 1)
    logits = jnp.where(col < out_dim, logits, -1e30)
    m = jnp.max(logits, axis=-1, keepdims=True)
    lse = jnp.log(jnp.sum(jnp.exp(logits - m), axis=-1, keepdims=True)) + m
    out_ref[...] = (logits - lse).astype(out_ref.dtype)


# --------------------------------------------------------------------------
# Helpers
# --------------------------------------------------------------------------

def _cdiv(a, b):
    return -(-a // b)


def _round_up(v, m):
    return ((v + m - 1) // m) * m


def _vmem_limit_bytes(tile_n, tile_k, hidden_p):
    """Estimate FALayer VMEM use (incl. lane/sublane padding of narrow blocks)
    and cap it below the physical per-core VMEM of the current generation."""
    adj = 2 * tile_n * tile_k * 2          # bf16 adj block, double-buffered
    hsrc = 2 * tile_k * hidden_p * 2       # bf16 source features
    sdst = 2 * tile_n * 128 * 4            # (tile_n, 1) f32 block pads to 128 lanes
    ssrc = 2 * 8 * tile_k * 4              # (1, tile_k) f32 block pads to 8 sublanes
    raw = 2 * tile_n * hidden_p * 4
    out = 2 * tile_n * hidden_p * 4
    tmp = tile_n * tile_k * 10             # f32 gate + bf16 gate/emat temporaries
    est = adj + hsrc + sdst + ssrc + raw + out + tmp + (4 << 20)

    cap = 48 << 20                         # always below v7x's 64 MiB per-TC VMEM
    try:
        cap = min(cap, int(pltpu.get_tpu_info().vmem_capacity_bytes) * 3 // 4)
    except Exception:
        pass
    return int(min(max(est, 16 << 20), cap))


def _default_gate_dtype(compute_dtype):
    """bf16 tanh on v6e/v7x (bf16 EUP); f32 on v5e (no bf16 EUP/VALU)."""
    try:
        kind = jax.devices()[0].device_kind.lower()
        if ("v5 lite" in kind) or ("v5e" in kind) or ("v5lite" in kind):
            return jnp.float32
    except Exception:
        pass
    return compute_dtype


# --------------------------------------------------------------------------
# Wrapper
# --------------------------------------------------------------------------

def fagcn_forward(x, adj, d, params, *, eps, layer_num, tile_n=512, tile_k=None,
                  compute_dtype=jnp.bfloat16, gate_dtype=None):
    """x: (N, in_dim); adj: (N, N) mask (adj[i, j] = edge j -> i); d: (N,) = deg^-0.5."""
    N, in_dim = x.shape
    hidden = params["t1_w"].shape[1]
    out_dim = params["t2_w"].shape[1]
    f32 = jnp.float32
    if gate_dtype is None:
        gate_dtype = _default_gate_dtype(compute_dtype)

    # --- tiling -------------------------------------------------------------
    tile_n = max(8, (int(tile_n) // 8) * 8)
    n_rows = _cdiv(N, tile_n)
    n_pad = n_rows * tile_n
    if tile_k is None:
        tile_k = tile_n
    tile_k = max(128, (int(tile_k) // 128) * 128)
    if tile_k > n_pad or n_pad % tile_k != 0:
        tile_k = n_pad                      # full-width column blocks for small graphs
    n_cols = n_pad // tile_k
    hidden_p = _round_up(hidden, 128)       # lane-dense hidden (zero-padding is exact)
    out_p = _round_up(out_dim, 128)

    # --- padded / pre-cast operands (grid-invariant casts done once) ---------
    x_p = jnp.zeros((n_pad, in_dim), compute_dtype).at[:N, :].set(x.astype(compute_dtype))
    # Degree scaling folded into the adjacency ONCE, built directly as bf16
    # (under jit the f32 multiply fuses into the cast -> no N^2 f32 HBM temp).
    dc = d.astype(f32)
    adj_p = jnp.zeros((n_pad, n_pad), compute_dtype).at[:N, :N].set(
        (adj.astype(f32) * dc[:, None] * dc[None, :]).astype(compute_dtype))

    w1p = jnp.zeros((in_dim, hidden_p), compute_dtype).at[:, :hidden].set(
        params["t1_w"].astype(compute_dtype))
    b1p = jnp.zeros((1, hidden_p), f32).at[:, :hidden].set(params["t1_b"])
    w2p = jnp.zeros((hidden_p, out_p), compute_dtype).at[:hidden, :out_dim].set(
        params["t2_w"].astype(compute_dtype))
    b2p = jnp.zeros((1, out_p), f32).at[:, :out_dim].set(params["t2_b"])

    vmem = _vmem_limit_bytes(tile_n, tile_k, hidden_p)
    cparams_row = pltpu.CompilerParams(
        dimension_semantics=("parallel",), vmem_limit_bytes=vmem)
    cparams_layer = pltpu.CompilerParams(
        dimension_semantics=("parallel", "arbitrary"), vmem_limit_bytes=vmem)

    # --- t1: h = relu(x @ W1 + b1) -------------------------------------------
    # NOTE: padded *rows* of x give h = relu(b1) != 0; harmless because padded
    # adjacency rows/columns are zero and the output is sliced back to N.
    # Padded hidden *columns* are exactly zero (relu(0 + 0) = 0) and stay zero
    # through every layer, which keeps the hidden zero-padding exact.
    h = pl.pallas_call(
        t1_kernel,
        out_shape=jax.ShapeDtypeStruct((n_pad, hidden_p), f32),
        grid=(n_rows,),
        in_specs=[pl.BlockSpec((tile_n, in_dim), lambda i: (i, 0)),
                  pl.BlockSpec((in_dim, hidden_p), lambda i: (0, 0)),
                  pl.BlockSpec((1, hidden_p), lambda i: (0, 0))],
        out_specs=pl.BlockSpec((tile_n, hidden_p), lambda i: (i, 0)),
        compiler_params=cparams_row,
    )(x_p, w1p, b1p)
    raw = h

    # --- FALayers: (row "parallel") x (column "arbitrary", accumulated) grid --
    layer_fn = pl.pallas_call(
        functools.partial(falayer_kernel, eps=float(eps),
                          gate_dtype=gate_dtype, compute_dtype=compute_dtype),
        out_shape=jax.ShapeDtypeStruct((n_pad, hidden_p), f32),
        grid=(n_rows, n_cols),
        in_specs=[pl.BlockSpec((tile_n, tile_k), lambda i, k: (i, k)),      # adj block
                  pl.BlockSpec((tile_k, hidden_p), lambda i, k: (k, 0)),    # h_src (bf16)
                  pl.BlockSpec((tile_n, 1), lambda i, k: (i, 0)),           # s_dst
                  pl.BlockSpec((1, tile_k), lambda i, k: (0, k)),           # s_src
                  pl.BlockSpec((1, 1), lambda i, k: (0, 0)),                # gate bias
                  pl.BlockSpec((tile_n, hidden_p), lambda i, k: (i, 0))],   # raw tile
        out_specs=pl.BlockSpec((tile_n, hidden_p), lambda i, k: (i, 0)),
        compiler_params=cparams_layer,
    )
    # TODO(synk): exploit graph sparsity — prefetch a per-row-tile list of
    # nonzero adjacency column blocks (PrefetchScalarGridSpec) and skip
    # all-zero blocks; kept dense here for simplicity/robustness.
    for l in range(layer_num):
        wd = jnp.zeros((1, hidden_p), f32).at[:, :hidden].set(
            params["gate_wd"][l].reshape(1, hidden))
        ws = jnp.zeros((1, hidden_p), f32).at[:, :hidden].set(
            params["gate_ws"][l].reshape(1, hidden))
        # O(N*H) per-layer precompute hoisted out of the per-tile kernel:
        # gate projections and the one-time bf16 cast of h (plain XLA — tiny
        # next to the N^2 in-kernel work and removes all O(N)-sized VMEM
        # residents from the FALayer kernel).
        s_dst = jnp.sum(h * wd, axis=1, keepdims=True)           # (n_pad, 1) f32
        s_src = jnp.sum(h * ws, axis=1, keepdims=True).T         # (1, n_pad) f32
        h_bf = h.astype(compute_dtype)
        h = layer_fn(adj_p, h_bf, s_dst, s_src, params["gate_b"][l], raw)

    # --- t2 + masked log_softmax on a lane-dense padded slab -----------------
    out_full = pl.pallas_call(
        functools.partial(t2_kernel, out_dim=out_dim),
        out_shape=jax.ShapeDtypeStruct((n_pad, out_p), f32),
        grid=(n_rows,),
        in_specs=[pl.BlockSpec((tile_n, hidden_p), lambda i: (i, 0)),
                  pl.BlockSpec((hidden_p, out_p), lambda i: (0, 0)),
                  pl.BlockSpec((1, out_p), lambda i: (0, 0))],
        out_specs=pl.BlockSpec((tile_n, out_p), lambda i: (i, 0)),
        compiler_params=cparams_row,
    )(h.astype(compute_dtype), w2p, b2p)

    return out_full[:N, :out_dim]


# --------------------------------------------------------------------------
# Plain-JAX reference.  compute_dtype=f32 -> exact FAGCN math;
# compute_dtype=bf16 + matching gate_dtype -> same casts at the same points
# as the kernels (tight numerical check of the kernel logic).
# --------------------------------------------------------------------------

def fagcn_reference(x, adj, d, params, *, eps, layer_num,
                    compute_dtype=jnp.float32, gate_dtype=None):
    cd = compute_dtype
    if gate_dtype is None:
        gate_dtype = cd
    f32 = jnp.float32

    def mm(a, b):
        return jnp.dot(a.astype(cd), b.astype(cd), preferred_element_type=f32)

    h = jnp.maximum(mm(x, params["t1_w"]) + params["t1_b"], 0.0)
    raw = h
    dc = d.astype(f32)
    adj_e = (adj.astype(f32) * dc[:, None] * dc[None, :]).astype(cd)
    for l in range(layer_num):
        wd = params["gate_wd"][l].reshape(1, -1)
        ws = params["gate_ws"][l].reshape(1, -1)
        s_dst = jnp.sum(h * wd, axis=1, keepdims=True)
        s_src = jnp.sum(h * ws, axis=1, keepdims=True)
        pre = s_dst + s_src.T + params["gate_b"][l]
        gate = jnp.tanh(pre.astype(gate_dtype)).astype(cd)
        emat = adj_e * gate
        h = eps * raw + jnp.dot(emat, h.astype(cd), preferred_element_type=f32)
    logits = mm(h, params["t2_w"]) + params["t2_b"]
    return jax.nn.log_softmax(logits, axis=1)


# --------------------------------------------------------------------------
# Parameter / graph construction
# --------------------------------------------------------------------------

def xavier_normal(key, shape_out_in, gain):
    fan_out, fan_in = shape_out_in
    std = gain * jnp.sqrt(2.0 / (fan_in + fan_out))
    return std * jax.random.normal(key, shape_out_in, dtype=jnp.float32)


def make_params(key, in_dim, hidden_dim, out_dim, layer_num):
    ks = jax.random.split(key, 4 + layer_num)
    gain = 1.414
    t1_w = xavier_normal(ks[0], (hidden_dim, in_dim), gain).T      # (in, hidden)
    t1_b = 0.01 * jax.random.normal(ks[1], (1, hidden_dim), dtype=jnp.float32)
    t2_w = xavier_normal(ks[2], (out_dim, hidden_dim), gain).T     # (hidden, out)
    t2_b = 0.01 * jax.random.normal(ks[3], (1, out_dim), dtype=jnp.float32)
    gwd, gws, gb = [], [], []
    for l in range(layer_num):
        w = xavier_normal(ks[4 + l], (1, 2 * hidden_dim), gain)    # gate(cat[dst,src])
        gwd.append(w[0, :hidden_dim].reshape(hidden_dim, 1))
        gws.append(w[0, hidden_dim:].reshape(hidden_dim, 1))
        gb.append(jnp.zeros((1, 1), dtype=jnp.float32))
    return {"t1_w": t1_w, "t1_b": t1_b, "t2_w": t2_w, "t2_b": t2_b,
            "gate_wd": jnp.stack(gwd), "gate_ws": jnp.stack(gws),
            "gate_b": jnp.stack(gb)}


def make_graph(key, n):
    """Symmetric ring graph + a few random undirected edges, no self loops."""
    adj = jnp.zeros((n, n), dtype=jnp.float32)
    idx = jnp.arange(n)
    adj = adj.at[idx, (idx + 1) % n].set(1.0)
    adj = adj.at[(idx + 1) % n, idx].set(1.0)
    src = jax.random.randint(key, (2 * n,), 0, n)
    dst = jax.random.randint(jax.random.fold_in(key, 1), (2 * n,), 0, n)
    keep = src != dst
    src = jnp.where(keep, src, (src + 1) % n)
    adj = adj.at[dst, src].set(1.0)
    adj = adj.at[src, dst].set(1.0)
    adj = adj * (1.0 - jnp.eye(n, dtype=jnp.float32))
    deg = jnp.sum(adj, axis=1)
    d = jnp.where(deg > 0, deg, 1.0) ** -0.5   # g.ndata['d'] = deg^-0.5
    return adj, d


if __name__ == "__main__":
    N, IN_DIM, HIDDEN, OUT_DIM = 256, 32, 32, 8
    LAYER_NUM, EPS = 2, 0.3
    TILE_N, TILE_K = 128, 128   # 2x2 (row, column) grid -> exercises both axes

    key = jax.random.PRNGKey(0)
    k_x, k_g, k_p = jax.random.split(key, 3)

    x = jax.random.normal(k_x, (N, IN_DIM), dtype=jnp.float32)
    adj, d = make_graph(k_g, N)
    params = make_params(k_p, IN_DIM, HIDDEN, OUT_DIM, LAYER_NUM)

    gate_dt = _default_gate_dtype(jnp.bfloat16)   # f32 on v5e, bf16 on v6e/v7x

    fwd = jax.jit(functools.partial(
        fagcn_forward, eps=EPS, layer_num=LAYER_NUM, tile_n=TILE_N, tile_k=TILE_K,
        compute_dtype=jnp.bfloat16, gate_dtype=gate_dt))
    out = jax.block_until_ready(fwd(x, adj, d, params))
    assert out.shape == (N, OUT_DIM)

    # Tight check vs precision-matched (same casts at the same points) reference.
    ref_matched = fagcn_reference(x, adj, d, params, eps=EPS, layer_num=LAYER_NUM,
                                  compute_dtype=jnp.bfloat16, gate_dtype=gate_dt)
    assert jnp.allclose(out, ref_matched, rtol=3e-3, atol=3e-3), \
        "mismatch vs precision-matched JAX reference"

    # Loose sanity check vs pure-f32 reference (bf16 adjacency / gate / MXU
    # inputs loosen numerics slightly).
    ref_f32 = fagcn_reference(x, adj, d, params, eps=EPS, layer_num=LAYER_NUM,
                              compute_dtype=jnp.float32, gate_dtype=jnp.float32)
    assert float(jnp.max(jnp.abs(out - ref_f32))) < 0.4, \
        "drifted too far from f32 reference"

    print("KERNEL_OK")
</pallas_src>

<mosaic_0001>
module attributes {stable_mosaic.version = 11 : i64} {
  func.func @t1_kernel(%arg0: i32, %arg1: memref<128x32xbf16, #tpu.memory_space<vmem>>, %arg2: memref<32x128xbf16, #tpu.memory_space<vmem>>, %arg3: memref<1x128xf32, #tpu.memory_space<vmem>>, %arg4: memref<128x128xf32, #tpu.memory_space<vmem>>) attributes {dimension_semantics = [#tpu.dimension_semantics<parallel>], iteration_bounds = array<i64: 2>, scalar_prefetch = 0 : i64, scratch_operands = 0 : i64, tpu.core_type = #tpu.core_type<tc>, window_params = [{transform_indices = @transform_0, window_bounds = array<i64: 128, 32>}, {pipeline_mode = #tpu.pipeline_mode<synchronous>, transform_indices = @transform_1, window_bounds = array<i64: 32, 128>}, {pipeline_mode = #tpu.pipeline_mode<synchronous>, transform_indices = @transform_2, window_bounds = array<i64: 1, 128>}, {transform_indices = @transform_3, window_bounds = array<i64: 128, 128>}]} {
    %c0 = arith.constant 0 : index
    %c0_0 = arith.constant 0 : index
    %0 = vector.load %arg1[%c0, %c0_0] : memref<128x32xbf16, #tpu.memory_space<vmem>>, vector<128x32xbf16>
    %c0_1 = arith.constant 0 : index
    %c0_2 = arith.constant 0 : index
    %1 = vector.load %arg2[%c0_1, %c0_2] : memref<32x128xbf16, #tpu.memory_space<vmem>>, vector<32x128xbf16>
    %cst = arith.constant dense<0.000000e+00> : vector<128x128xf32>
    %2 = tpu.matmul %0, %1, %cst {dimension_numbers = #tpu.dot_dimension_numbers<[1], [0], [0], [1], [0, 0, 1, 1], [], []>} : vector<128x32xbf16>, vector<32x128xbf16>, vector<128x128xf32> -> vector<128x128xf32>
    %c0_3 = arith.constant 0 : index
    %c0_4 = arith.constant 0 : index
    %3 = vector.load %arg3[%c0_3, %c0_4] : memref<1x128xf32, #tpu.memory_space<vmem>>, vector<1x128xf32>
    %4 = vector.broadcast %3 : vector<1x128xf32> to vector<128x128xf32>
    %5 = arith.addf %2, %4 : vector<128x128xf32>
    %cst_5 = arith.constant 0.000000e+00 : f32
    %6 = vector.broadcast %cst_5 : f32 to vector<128x128xf32>
    %7 = arith.maximumf %5, %6 : vector<128x128xf32>
    %c0_6 = arith.constant 0 : index
    %c0_7 = arith.constant 0 : index
    %8 = vector.load %arg4[%c0_6, %c0_7] : memref<128x128xf32, #tpu.memory_space<vmem>>, vector<128x128xf32>
    tpu.vector_store %arg4[%c0_6, %c0_7], %7 {strides = array<i32>} : memref<128x128xf32, #tpu.memory_space<vmem>>, vector<128x128xf32>,
    return
  }
  func.func @transform_0(%arg0: i32) -> (i32, i32) {
    %c0_i32 = arith.constant 0 : i32
    %c0_i32_0 = arith.constant 0 : i32
    return %arg0, %c0_i32 : i32, i32
  }
  func.func @transform_1(%arg0: i32) -> (i32, i32) {
    %c0_i32 = arith.constant 0 : i32
    %c0_i32_0 = arith.constant 0 : i32
    %c0_i32_1 = arith.constant 0 : i32
    return %c0_i32, %c0_i32_0 : i32, i32
  }
  func.func @transform_2(%arg0: i32) -> (i32, i32) {
    %c0_i32 = arith.constant 0 : i32
    %c0_i32_0 = arith.constant 0 : i32
    %c0_i32_1 = arith.constant 0 : i32
    return %c0_i32, %c0_i32_0 : i32, i32
  }
  func.func @transform_3(%arg0: i32) -> (i32, i32) {
    %c0_i32 = arith.constant 0 : i32
    %c0_i32_0 = arith.constant 0 : i32
    return %arg0, %c0_i32 : i32, i32
  }
}

module attributes {stable_mosaic.version = 11 : i64} {
  func.func @falayer_kernel(%arg0: i32, %arg1: i32, %arg2: memref<128x128xbf16, #tpu.memory_space<vmem>>, %arg3: memref<128x128xbf16, #tpu.memory_space<vmem>>, %arg4: memref<128x1xf32, #tpu.memory_space<vmem>>, %arg5: memref<1x128xf32, #tpu.memory_space<vmem>>, %arg6: memref<1x1xf32, #tpu.memory_space<vmem>>, %arg7: memref<128x128xf32, #tpu.memory_space<vmem>>, %arg8: memref<128x128xf32, #tpu.memory_space<vmem>>) attributes {dimension_semantics = [#tpu.dimension_semantics<parallel>, #tpu.dimension_semantics<arbitrary>], iteration_bounds = array<i64: 2, 2>, scalar_prefetch = 0 : i64, scratch_operands = 0 : i64, tpu.core_type = #tpu.core_type<tc>, window_params = [{transform_indices = @transform_0, window_bounds = array<i64: 128, 128>}, {transform_indices = @transform_1, window_bounds = array<i64: 128, 128>}, {transform_indices = @transform_2, window_bounds = array<i64: 128, 1>}, {transform_indices = @transform_3, window_bounds = array<i64: 1, 128>}, {pipeline_mode = #tpu.pipeline_mode<synchronous>, transform_indices = @transform_4, window_bounds = array<i64: 1, 1>}, {transform_indices = @transform_5, window_bounds = array<i64: 128, 128>}, {transform_indices = @transform_6, window_bounds = array<i64: 128, 128>}]} {
    %c0_i32 = arith.constant 0 : i32
    %0 = arith.cmpi eq, %arg1, %c0_i32 : i32
    %1 = arith.extui %0 : i1 to i32
    %c0_i32_0 = arith.constant 0 : i32
    %2 = arith.cmpi ne, %1, %c0_i32_0 : i32
    scf.if %2 {
      %c0_14 = arith.constant 0 : index
      %c0_15 = arith.constant 0 : index
      %20 = vector.load %arg7[%c0_14, %c0_15] : memref<128x128xf32, #tpu.memory_space<vmem>>, vector<128x128xf32>
      %cst_16 = arith.constant 3.000000e-01 : f32
      %21 = vector.broadcast %cst_16 : f32 to vector<128x128xf32>
      %22 = arith.mulf %21, %20 : vector<128x128xf32>
      %c0_17 = arith.constant 0 : index
      %c0_18 = arith.constant 0 : index
      %23 = vector.load %arg8[%c0_17, %c0_18] : memref<128x128xf32, #tpu.memory_space<vmem>>, vector<128x128xf32>
      tpu.vector_store %arg8[%c0_17, %c0_18], %22 {strides = array<i32>} : memref<128x128xf32, #tpu.memory_space<vmem>>, vector<128x128xf32>,
    } else {
    }
    %c0 = arith.constant 0 : index
    %c0_1 = arith.constant 0 : index
    %3 = vector.load %arg4[%c0, %c0_1] : memref<128x1xf32, #tpu.memory_space<vmem>>, vector<128x1xf32>
    %c0_2 = arith.constant 0 : index
    %c0_3 = arith.constant 0 : index
    %4 = vector.load %arg5[%c0_2, %c0_3] : memref<1x128xf32, #tpu.memory_space<vmem>>, vector<1x128xf32>
    %5 = vector.broadcast %3 : vector<128x1xf32> to vector<128x128xf32>
    %6 = vector.broadcast %4 : vector<1x128xf32> to vector<128x128xf32>
    %7 = arith.addf %5, %6 : vector<128x128xf32>
    %c0_4 = arith.constant 0 : index
    %c0_5 = arith.constant 0 : index
    %8 = vector.load %arg6[%c0_4, %c0_5] : memref<1x1xf32, #tpu.memory_space<vmem>>, vector<1x1xf32>
    %9 = vector.broadcast %8 : vector<1x1xf32> to vector<128x128xf32>
    %10 = arith.addf %7, %9 : vector<128x128xf32>
    %11 = arith.truncf %10 : vector<128x128xf32> to vector<128x128xbf16>
    %12 = math.tanh %11 : vector<128x128xbf16>
    %c0_6 = arith.constant 0 : index
    %c0_7 = arith.constant 0 : index
    %13 = vector.load %arg2[%c0_6, %c0_7] : memref<128x128xbf16, #tpu.memory_space<vmem>>, vector<128x128xbf16>
    %14 = arith.mulf %13, %12 : vector<128x128xbf16>
    %c0_8 = arith.constant 0 : index
    %c0_9 = arith.constant 0 : index
    %15 = vector.load %arg8[%c0_8, %c0_9] : memref<128x128xf32, #tpu.memory_space<vmem>>, vector<128x128xf32>
    %c0_10 = arith.constant 0 : index
    %c0_11 = arith.constant 0 : index
    %16 = vector.load %arg3[%c0_10, %c0_11] : memref<128x128xbf16, #tpu.memory_space<vmem>>, vector<128x128xbf16>
    %cst = arith.constant dense<0.000000e+00> : vector<128x128xf32>
    %17 = tpu.matmul %14, %16, %cst {dimension_numbers = #tpu.dot_dimension_numbers<[1], [0], [0], [1], [0, 0, 1, 1], [], []>} : vector<128x128xbf16>, vector<128x128xbf16>, vector<128x128xf32> -> vector<128x128xf32>
    %18 = arith.addf %15, %17 : vector<128x128xf32>
    %c0_12 = arith.constant 0 : index
    %c0_13 = arith.constant 0 : index
    %19 = vector.load %arg8[%c0_12, %c0_13] : memref<128x128xf32, #tpu.memory_space<vmem>>, vector<128x128xf32>
    tpu.vector_store %arg8[%c0_12, %c0_13], %18 {strides = array<i32>} : memref<128x128xf32, #tpu.memory_space<vmem>>, vector<128x128xf32>,
    return
  }
  func.func @transform_0(%arg0: i32, %arg1: i32) -> (i32, i32) {
    %c0_i32 = arith.constant 0 : i32
    return %arg0, %arg1 : i32, i32
  }
  func.func @transform_1(%arg0: i32, %arg1: i32) -> (i32, i32) {
    %c0_i32 = arith.constant 0 : i32
    %c0_i32_0 = arith.constant 0 : i32
    return %arg1, %c0_i32 : i32, i32
  }
  func.func @transform_2(%arg0: i32, %arg1: i32) -> (i32, i32) {
    %c0_i32 = arith.constant 0 : i32
    %c0_i32_0 = arith.constant 0 : i32
    return %arg0, %c0_i32 : i32, i32
  }
  func.func @transform_3(%arg0: i32, %arg1: i32) -> (i32, i32) {
    %c0_i32 = arith.constant 0 : i32
    %c0_i32_0 = arith.constant 0 : i32
    return %c0_i32, %arg1 : i32, i32
  }
  func.func @transform_4(%arg0: i32, %arg1: i32) -> (i32, i32) {
    %c0_i32 = arith.constant 0 : i32
    %c0_i32_0 = arith.constant 0 : i32
    %c0_i32_1 = arith.constant 0 : i32
    return %c0_i32, %c0_i32_0 : i32, i32
  }
  func.func @transform_5(%arg0: i32, %arg1: i32) -> (i32, i32) {
    %c0_i32 = arith.constant 0 : i32
    %c0_i32_0 = arith.constant 0 : i32
    return %arg0, %c0_i32 : i32, i32
  }
  func.func @transform_6(%arg0: i32, %arg1: i32) -> (i32, i32) {
    %c0_i32 = arith.constant 0 : i32
    %c0_i32_0 = arith.constant 0 : i32
    return %arg0, %c0_i32 : i32, i32
  }
}

module attributes {stable_mosaic.version = 11 : i64} {
  func.func @t2_kernel(%arg0: i32, %arg1: memref<128x128xbf16, #tpu.memory_space<vmem>>, %arg2: memref<128x128xbf16, #tpu.memory_space<vmem>>, %arg3: memref<1x128xf32, #tpu.memory_space<vmem>>, %arg4: memref<128x128xf32, #tpu.memory_space<vmem>>) attributes {dimension_semantics = [#tpu.dimension_semantics<parallel>], iteration_bounds = array<i64: 2>, scalar_prefetch = 0 : i64, scratch_operands = 0 : i64, tpu.core_type = #tpu.core_type<tc>, window_params = [{transform_indices = @transform_0, window_bounds = array<i64: 128, 128>}, {pipeline_mode = #tpu.pipeline_mode<synchronous>, transform_indices = @transform_1, window_bounds = array<i64: 128, 128>}, {pipeline_mode = #tpu.pipeline_mode<synchronous>, transform_indices = @transform_2, window_bounds = array<i64: 1, 128>}, {transform_indices = @transform_3, window_bounds = array<i64: 128, 128>}]} {
    %c0 = arith.constant 0 : index
    %c0_0 = arith.constant 0 : index
    %0 = vector.load %arg1[%c0, %c0_0] : memref<128x128xbf16, #tpu.memory_space<vmem>>, vector<128x128xbf16>
    %c0_1 = arith.constant 0 : index
    %c0_2 = arith.constant 0 : index
    %1 = vector.load %arg2[%c0_1, %c0_2] : memref<128x128xbf16, #tpu.memory_space<vmem>>, vector<128x128xbf16>
    %cst = arith.constant dense<0.000000e+00> : vector<128x128xf32>
    %2 = tpu.matmul %0, %1, %cst {dimension_numbers = #tpu.dot_dimension_numbers<[1], [0], [0], [1], [0, 0, 1, 1], [], []>} : vector<128x128xbf16>, vector<128x128xbf16>, vector<128x128xf32> -> vector<128x128xf32>
    %c0_3 = arith.constant 0 : index
    %c0_4 = arith.constant 0 : index
    %3 = vector.load %arg3[%c0_3, %c0_4] : memref<1x128xf32, #tpu.memory_space<vmem>>, vector<1x128xf32>
    %4 = vector.broadcast %3 : vector<1x128xf32> to vector<128x128xf32>
    %5 = arith.addf %2, %4 : vector<128x128xf32>
    %6 = tpu.iota {dimensions = array<i32: 1>} : vector<128x128xi32>
    %c8_i32 = arith.constant 8 : i32
    %7 = vector.broadcast %c8_i32 : i32 to vector<128x128xi32>
    %8 = arith.cmpi slt, %6, %7 : vector<128x128xi32>
    %cst_5 = arith.constant -1.000000e+30 : f32
    %9 = vector.broadcast %cst_5 : f32 to vector<128x128xf32>
    %10 = arith.select %8, %5, %9 : vector<128x128xi1>, vector<128x128xf32>
    %cst_6 = arith.constant dense<0xFF800000> : vector<128xf32>
    %11 = vector.multi_reduction <maximumf>, %10, %cst_6 [1] : vector<128x128xf32> to vector<128xf32>
    %12 = vector.shape_cast %11 : vector<128xf32> to vector<128x1xf32>
    %13 = vector.broadcast %12 : vector<128x1xf32> to vector<128x128xf32>
    %14 = arith.subf %10, %13 : vector<128x128xf32>
    %15 = math.exp %14 : vector<128x128xf32>
    %cst_7 = arith.constant dense<0.000000e+00> : vector<128xf32>
    %16 = vector.multi_reduction <add>, %15, %cst_7 [1] : vector<128x128xf32> to vector<128xf32>
    %17 = vector.shape_cast %16 : vector<128xf32> to vector<128x1xf32>
    %18 = math.log %17 : vector<128x1xf32>
    %19 = arith.addf %18, %12 : vector<128x1xf32>
    %20 = vector.broadcast %19 : vector<128x1xf32> to vector<128x128xf32>
    %21 = arith.subf %10, %20 : vector<128x128xf32>
    %c0_8 = arith.constant 0 : index
    %c0_9 = arith.constant 0 : index
    %22 = vector.load %arg4[%c0_8, %c0_9] : memref<128x128xf32, #tpu.memory_space<vmem>>, vector<128x128xf32>
    tpu.vector_store %arg4[%c0_8, %c0_9], %21 {strides = array<i32>} : memref<128x128xf32, #tpu.memory_space<vmem>>, vector<128x128xf32>,
    return
  }
  func.func @transform_0(%arg0: i32) -> (i32, i32) {
    %c0_i32 = arith.constant 0 : i32
    %c0_i32_0 = arith.constant 0 : i32
    return %arg0, %c0_i32 : i32, i32
  }
  func.func @transform_1(%arg0: i32) -> (i32, i32) {
    %c0_i32 = arith.constant 0 : i32
    %c0_i32_0 = arith.constant 0 : i32
    %c0_i32_1 = arith.constant 0 : i32
    return %c0_i32, %c0_i32_0 : i32, i32
  }
  func.func @transform_2(%arg0: i32) -> (i32, i32) {
    %c0_i32 = arith.constant 0 : i32
    %c0_i32_0 = arith.constant 0 : i32
    %c0_i32_1 = arith.constant 0 : i32
    return %c0_i32, %c0_i32_0 : i32, i32
  }
  func.func @transform_3(%arg0: i32) -> (i32, i32) {
    %c0_i32 = arith.constant 0 : i32
    %c0_i32_0 = arith.constant 0 : i32
    return %arg0, %c0_i32 : i32, i32
  }
}

</mosaic_0001>

<llo_original>
// kernel: fagcn_forward.4
$region0: #{fagcn_forward.4}
  #allocation0 [shape = 'u32[]', space=smem, size = 0x4, offset = 0x4, fixed_abs, tag = 'smem constant byte address 0x4 - core index']
  #allocation1 [shape = 'u32[72,128]{1,0:T(1,128)}', space=vmem, size = 0x9000, scoped, tag = 'internal scratch']
  %s0 = inlined_call_operand.vmem [shape: bf16[256,32], index: 0, kind: input, shape index: {}]
  %s1 = inlined_call_operand.vmem [shape: bf16[32,128], index: 1, kind: input, shape index: {}]
  %s2 = inlined_call_operand.vmem [shape: f32[1,128], index: 2, kind: input, shape index: {}]
  %s3 = inlined_call_operand.vmem [shape: f32[256,128], index: 3, kind: output, shape index: {}]
  %s4 = sld [smem:[#allocation0]]
  $region45: #{fagcn_forward.4} parent=0
    _
  %s6 = ssub.s32 1, %s4
  %s7 = scalar_select 0, %s6, %s4
  loop: start=0, step=1, limit=4
  $region2: #{fagcn_forward.4} parent=0 // loop_pre_header
    _
  $region3: #{fagcn_forward.4} parent=0 // loop_header
    %s9 = sphi 0, %s13
    %p10 = scmp.ge.s32.totalorder %s9, 4
    %s19 = sphi 0, %s21
    %s22 = sphi 0, %s19
    %s23 = sphi 0, %s22
    %s39 = sphi 0, %s23
    %s43 = sphi 0, %s43
    %s45 = sphi 0, %s43
    %s46 = sphi 0, %s45
    %s60 = sphi 0, %s46
    %s64 = sphi 0, %s64
    %s66 = sphi 0, %s64
    %s67 = sphi 0, %s66
    %s81 = sphi 0, %s67
    %s87 = sphi 0, %s89
    %s90 = sphi 0, %s87
    %s91 = sphi 0, %s90
    %s107 = sphi 0, %s91
  $region4: #{fagcn_forward.4} parent=0 // loop_header_branch
    %12 = sbr.rel (%p10) target = $region8
  $region5: #{fagcn_forward.4} parent=0 // loop_body
    %s14 = ssub.s32 %s9, 1
    %s15 = ssub.s32 %s9, 2
    %s16 = sadd.s32 %s9, 1
    %s17 = ssub.s32 %s9, %s16
    %p18 = scmp.eq.s32.totalorder %s17, 0
    %s20 = sadd.s32 %s19, 1
    %s21 = scalar_select %p18, %s19, %s20
    %p24 = pneg %p18
    %p25 = scmp.eq.s32.totalorder %s9, 1
    %p26 = por %p24, %p25
    %p27 = scmp.ne.s32.totalorder %s19, %s22
    %p28 = scmp.eq.s32.totalorder %s9, 0
    %p29 = por %p27, %p28
    %p30 = scmp.ne.s32.totalorder %s19, %s22
    %p31 = scmp.eq.s32.totalorder %s14, 1
    %p32 = por %p30, %p31
    %p33 = scmp.ne.s32.totalorder %s22, %s23
    %p34 = scmp.eq.s32.totalorder %s14, 0
    %p35 = por %p33, %p34
    %p36 = scmp.ne.s32.totalorder %s22, %s23
    %p37 = scmp.eq.s32.totalorder %s15, 1
    %p38 = por %p36, %p37
    %p40 = scmp.ne.s32.totalorder %s23, %s39
    %p41 = scmp.eq.s32.totalorder %s15, 0
    %p42 = por %p40, %p41
    %s44 = sadd.s32 %s43, 1
    %p47 = scmp.eq.s32.totalorder %s9, 1
    %p48 = scmp.ne.s32.totalorder %s43, %s45
    %p49 = scmp.eq.s32.totalorder %s9, 0
    %p50 = por %p48, %p49
    %p51 = scmp.ne.s32.totalorder %s43, %s45
    %p52 = scmp.eq.s32.totalorder %s14, 1
    %p53 = por %p51, %p52
    %p54 = scmp.ne.s32.totalorder %s45, %s46
    %p55 = scmp.eq.s32.totalorder %s14, 0
    %p56 = por %p54, %p55
    %p57 = scmp.ne.s32.totalorder %s45, %s46
    %p58 = scmp.eq.s32.totalorder %s15, 1
    %p59 = por %p57, %p58
    %p61 = scmp.ne.s32.totalorder %s46, %s60
    %p62 = scmp.eq.s32.totalorder %s15, 0
    %p63 = por %p61, %p62
    %s65 = sadd.s32 %s64, 1
    %p68 = scmp.eq.s32.totalorder %s9, 1
    %p69 = scmp.ne.s32.totalorder %s64, %s66
    %p70 = scmp.eq.s32.totalorder %s9, 0
    %p71 = por %p69, %p70
    %p72 = scmp.ne.s32.totalorder %s64, %s66
    %p73 = scmp.eq.s32.totalorder %s14, 1
    %p74 = por %p72, %p73
    %p75 = scmp.ne.s32.totalorder %s66, %s67
    %p76 = scmp.eq.s32.totalorder %s14, 0
    %p77 = por %p75, %p76
    %p78 = scmp.ne.s32.totalorder %s66, %s67
    %p79 = scmp.eq.s32.totalorder %s15, 1
    %p80 = por %p78, %p79
    %p82 = scmp.ne.s32.totalorder %s67, %s81
    %p83 = scmp.eq.s32.totalorder %s15, 0
    %p84 = por %p82, %p83
    %s85 = ssub.s32 %s9, %s16
    %p86 = scmp.eq.s32.totalorder %s85, 0
    %s88 = sadd.s32 %s87, 1
    %s89 = scalar_select %p86, %s87, %s88
    %p92 = pneg %p86
    %p93 = scmp.eq.s32.totalorder %s9, 1
    %p94 = por %p92, %p93
    %p95 = scmp.ne.s32.totalorder %s87, %s90
    %p96 = scmp.eq.s32.totalorder %s9, 0
    %p97 = por %p95, %p96
    %p98 = scmp.ne.s32.totalorder %s87, %s90
    %p99 = scmp.eq.s32.totalorder %s14, 1
    %p100 = por %p98, %p99
    %p101 = scmp.ne.s32.totalorder %s90, %s91
    %p102 = scmp.eq.s32.totalorder %s14, 0
    %p103 = por %p101, %p102
    %p104 = scmp.ne.s32.totalorder %s90, %s91
    %p105 = scmp.eq.s32.totalorder %s15, 1
    %p106 = por %p104, %p105
    %p108 = scmp.ne.s32.totalorder %s91, %s107
    %p109 = scmp.eq.s32.totalorder %s15, 0
    %p110 = por %p108, %p109
    %p111 = scmp.le.s32.totalorder 1, %s9
    %p112 = scmp.lt.s32.totalorder %s9, 3
    %p113 = pnand %p111, %p112
    %p114 = pneg %p113
    // Predicated region
    $region9: #{fagcn_forward.4} parent=5 // pred_check
      _
    $region10: #{fagcn_forward.4} parent=5 // pred_check_branch
      %116 = sbr.rel (%p113) target = $region12
    $region11: #{fagcn_forward.4} parent=5 // pred_region
      %s117 = ssub.s32 %s9, 1
      // Predicated region
      $region13: #{fagcn_forward.4} parent=11 // pred_check
        %p118 = pneg %p56
      $region14: #{fagcn_forward.4} parent=11 // pred_check_branch
        %120 = sbr.rel (%p118) target = $region16
      $region15: #{fagcn_forward.4} parent=11 // pred_region
        _
      $region16: #{fagcn_forward.4} parent=11 // pred_fallthru
        _
      // Predicated region
      $region17: #{fagcn_forward.4} parent=11 // pred_check
        %p121 = pneg %p77
      $region18: #{fagcn_forward.4} parent=11 // pred_check_branch
        %123 = sbr.rel (%p121) target = $region20
      $region19: #{fagcn_forward.4} parent=11 // pred_region
        _
      $region20: #{fagcn_forward.4} parent=11 // pred_fallthru
        _
    $region12: #{fagcn_forward.4} parent=5 // pred_fallthru
      _
    %p124 = scmp.lt.s32.totalorder %s9, 2
    // Predicated region
    $region21: #{fagcn_forward.4} parent=5 // pred_check
      %p125 = pneg %p124
    $region22: #{fagcn_forward.4} parent=5 // pred_check_branch
      %127 = sbr.rel (%p125) target = $region24
    $region23: #{fagcn_forward.4} parent=5 // pred_region
      // Predicated region
      $region25: #{fagcn_forward.4} parent=23 // pred_check
        %p128 = pneg %p29
      $region26: #{fagcn_forward.4} parent=23 // pred_check_branch
        %130 = sbr.rel (%p128) target = $region28
      $region27: #{fagcn_forward.4} parent=23 // pred_region
        %s131 = smul.u32 16, %s9
        %p132 = scmp.lt.s32.totalorder %s131, 31
        %s133 = scalar_select %p132, %s131, 31
        %s134 = smul.addr %s133, 4
        %s135 = scalar_lea.vmem %s0, %s134
        %s136 = smul.u32 16, %s9
      $region28: #{fagcn_forward.4} parent=23 // pred_fallthru
        _
    $region24: #{fagcn_forward.4} parent=5 // pred_fallthru
      _
    %p137 = scmp.le.s32.totalorder 1, %s9
    %p138 = scmp.lt.s32.totalorder %s9, 3
    %p139 = pnand %p137, %p138
    %p140 = pneg %p139
    // Predicated region
    $region29: #{fagcn_forward.4} parent=5 // pred_check
      _
    $region30: #{fagcn_forward.4} parent=5 // pred_check_branch
      %142 = sbr.rel (%p139) target = $region32
    $region31: #{fagcn_forward.4} parent=5 // pred_region
      %s143 = ssub.s32 %s9, 1
      %s144 = smul.u32 16, %s14
      %p145 = scmp.lt.s32.totalorder %s144, 31
      %s146 = scalar_select %p145, %s144, 31
      %s147 = smul.addr %s146, 4
      %s148 = scalar_lea.vmem %s0, %s147
      %p149 = pneg %p35
      %p150 = pneg %p32
      %p151 = pneg %p56
      %p152 = pneg %p53
      %p153 = pneg %p77
      %p154 = pneg %p74
      %p155 = pneg %p103
      %p156 = pneg %p100
      %s157 = smul.u32 16, %s14
      %p158 = scmp.lt.s32.totalorder %s157, 31
      %s159 = scalar_select %p158, %s157, 31
      %s160 = smul.addr %s159, 8
      %s161 = scalar_lea.vmem %s3, %s160
      %s162 = smul.u32 16, %s14
      %p163 = scmp.lt.s32.totalorder %s162, 31
      %s164 = scalar_select %p163, %s162, 31
      %s165 = smul.addr %s164, 4
      %s166 = scalar_lea.vmem %s0, %s165
      %s167 = smul.u32 16, %s14
      %s168 = smul.u32 16, %s14
      %p169 = scmp.lt.s32.totalorder %s168, 31
      %s170 = scalar_select %p169, %s168, 31
      %s171 = smul.addr %s170, 8
      %s172 = scalar_lea.vmem %s3, %s171
      %s173 = smul.u32 16, %s14
      %v175 = vld [vmem:[%s166] sm:$0xf]
      %v176 = vld [vmem:[%s166 + $0x4] sm:$0xf]
      %v177 = vld [vmem:[%s166 + $0x8] sm:$0xf]
      %v178 = vld [vmem:[%s166 + $0xc] sm:$0xf]
      %v179 = vld [vmem:[%s166 + $0x10] sm:$0xf]
      %v180 = vld [vmem:[%s166 + $0x14] sm:$0xf]
      %v181 = vld [vmem:[%s166 + $0x18] sm:$0xf]
      %v182 = vld [vmem:[%s166 + $0x1c] sm:$0xf]
      %v183 = vld [vmem:[%s166 + $0x20] sm:$0xf]
      %v184 = vld [vmem:[%s166 + $0x24] sm:$0xf]
      %v185 = vld [vmem:[%s166 + $0x28] sm:$0xf]
      %v186 = vld [vmem:[%s166 + $0x2c] sm:$0xf]
      %v187 = vld [vmem:[%s166 + $0x30] sm:$0xf]
      %v188 = vld [vmem:[%s166 + $0x34] sm:$0xf]
      %v189 = vld [vmem:[%s166 + $0x38] sm:$0xf]
      %v190 = vld [vmem:[%s166 + $0x3c] sm:$0xf]
      %v191 = vld [vmem:[%s1] sm:$0xf]
      %v192 = vld [vmem:[%s1 + $0x4] sm:$0xf]
      %v193 = vld [vmem:[%s1 + $0x8] sm:$0xf]
      %v194 = vld [vmem:[%s1 + $0xc] sm:$0xf]
      %v195 = vld [vmem:[%s2] sm:$0x1]
      %v197 = vperm.slane %v195, 0
      %v215 = vunpack.c.l.b16 %v175
      %v216 = vunpack.c.l.b16 %v176
      %v217 = vunpack.c.l.b16 %v177
      %v218 = vunpack.c.l.b16 %v178
      %v219 = vunpack.c.l.b16 %v179
      %v220 = vunpack.c.l.b16 %v180
      %v221 = vunpack.c.l.b16 %v181
      %v222 = vunpack.c.l.b16 %v182
      %v223 = vunpack.c.l.b16 %v183
      %v224 = vunpack.c.l.b16 %v184
      %v225 = vunpack.c.l.b16 %v185
      %v226 = vunpack.c.l.b16 %v186
      %v227 = vunpack.c.l.b16 %v187
      %v228 = vunpack.c.l.b16 %v188
      %v229 = vunpack.c.l.b16 %v189
      %v230 = vunpack.c.l.b16 %v190
      %v231 = vpack.c.b16 %v216, %v215
      %v232 = vpack.c.b16 %v218, %v217
      %v233 = vpack.c.b16 %v220, %v219
      %v234 = vpack.c.b16 %v222, %v221
      %v235 = vpack.c.b16 %v224, %v223
      %v236 = vpack.c.b16 %v226, %v225
      %v237 = vpack.c.b16 %v228, %v227
      %v238 = vpack.c.b16 %v230, %v229
      %v243 = vunpack.c.l.b16 %v191
      %v244 = vunpack.c.l.b16 %v192
      %v245 = vunpack.c.l.b16 %v193
      %v246 = vunpack.c.l.b16 %v194
      %v247 = vpack.c.b16 %v244, %v243
      %v248 = vpack.c.b16 %v246, %v245
      %vm251 = vcmask 261120
      %v253 = vsel %vm251, %v231, 0
      %v256 = vsel %vm251, %v232, 0
      %v259 = vsel %vm251, %v233, 0
      %v262 = vsel %vm251, %v234, 0
      %v265 = vsel %vm251, %v235, 0
      %v268 = vsel %vm251, %v236, 0
      %v271 = vsel %vm251, %v237, 0
      %v274 = vsel %vm251, %v238, 0
      %276 = vmatpush.bf16.msra.mxu0 0
      %277 = vmatpush.bf16.msra.mxu0 0
      %278 = vmatpush.bf16.msra.mxu0 0
      %279 = vmatpush.bf16.msra.mxu0 0
      %280 = vmatpush.bf16.msra.mxu0 0
      %281 = vmatpush.bf16.msra.mxu0 0
      %282 = vmatpush.bf16.msra.mxu0 %v248
      %283 = vmatpush.bf16.msra.mxu0 %v247
      %284 = vmatmul.bf16.gmra.mxu0 %v253
      %v285 = vpop.f32.mrf.mxu0
      %v286 = vadd.f32 %v197, %v285
      %v287 = vpop.f32.mrf.mxu0
      %v288 = vadd.f32 %v197, %v287
      %289 = vmatmul.bf16.gmra.mxu0 %v256
      %v290 = vpop.f32.mrf.mxu0
      %v291 = vadd.f32 %v197, %v290
      %v292 = vpop.f32.mrf.mxu0
      %v293 = vadd.f32 %v197, %v292
      %294 = vmatmul.bf16.gmra.mxu0 %v259
      %v295 = vpop.f32.mrf.mxu0
      %v296 = vadd.f32 %v197, %v295
      %v297 = vpop.f32.mrf.mxu0
      %v298 = vadd.f32 %v197, %v297
      %299 = vmatmul.bf16.gmra.mxu0 %v262
      %v300 = vpop.f32.mrf.mxu0
      %v301 = vadd.f32 %v197, %v300
      %v302 = vpop.f32.mrf.mxu0
      %v303 = vadd.f32 %v197, %v302
      %304 = vmatmul.bf16.gmra.mxu0 %v265
      %v305 = vpop.f32.mrf.mxu0
      %v306 = vadd.f32 %v197, %v305
      %v307 = vpop.f32.mrf.mxu0
      %v308 = vadd.f32 %v197, %v307
      %309 = vmatmul.bf16.gmra.mxu0 %v268
      %v310 = vpop.f32.mrf.mxu0
      %v311 = vadd.f32 %v197, %v310
      %v312 = vpop.f32.mrf.mxu0
      %v313 = vadd.f32 %v197, %v312
      %314 = vmatmul.bf16.gmra.mxu0 %v271
      %v315 = vpop.f32.mrf.mxu0
      %v316 = vadd.f32 %v197, %v315
      %v317 = vpop.f32.mrf.mxu0
      %v318 = vadd.f32 %v197, %v317
      %319 = vmatmul.bf16.gmra.mxu0 %v274
      %v320 = vpop.f32.mrf.mxu0
      %v321 = vadd.f32 %v197, %v320
      %v322 = vpop.f32.mrf.mxu0
      %v323 = vadd.f32 %v197, %v322
      %324 = vdwg.mxu0
      %v325 = vmax.f32 %v286, 0.0
      %v326 = vmax.f32 %v288, 0.0
      %v327 = vmax.f32 %v291, 0.0
      %v328 = vmax.f32 %v293, 0.0
      %v329 = vmax.f32 %v296, 0.0
      %v330 = vmax.f32 %v298, 0.0
      %v331 = vmax.f32 %v301, 0.0
      %v332 = vmax.f32 %v303, 0.0
      %v333 = vmax.f32 %v306, 0.0
      %v334 = vmax.f32 %v308, 0.0
      %v335 = vmax.f32 %v311, 0.0
      %v336 = vmax.f32 %v313, 0.0
      %v337 = vmax.f32 %v316, 0.0
      %v338 = vmax.f32 %v318, 0.0
      %v339 = vmax.f32 %v321, 0.0
      %v340 = vmax.f32 %v323, 0.0
      %341 = vst [vmem:[%s172] sm:$0xff] %v325
      %342 = vst [vmem:[%s172 + $0x8] sm:$0xff] %v326
      %343 = vst [vmem:[%s172 + $0x10] sm:$0xff] %v327
      %344 = vst [vmem:[%s172 + $0x18] sm:$0xff] %v328
      %345 = vst [vmem:[%s172 + $0x20] sm:$0xff] %v329
      %346 = vst [vmem:[%s172 + $0x28] sm:$0xff] %v330
      %347 = vst [vmem:[%s172 + $0x30] sm:$0xff] %v331
      %348 = vst [vmem:[%s172 + $0x38] sm:$0xff] %v332
      %349 = vst [vmem:[%s172 + $0x40] sm:$0xff] %v333
      %350 = vst [vmem:[%s172 + $0x48] sm:$0xff] %v334
      %351 = vst [vmem:[%s172 + $0x50] sm:$0xff] %v335
      %352 = vst [vmem:[%s172 + $0x58] sm:$0xff] %v336
      %353 = vst [vmem:[%s172 + $0x60] sm:$0xff] %v337
      %354 = vst [vmem:[%s172 + $0x68] sm:$0xff] %v338
      %355 = vst [vmem:[%s172 + $0x70] sm:$0xff] %v339
      %356 = vst [vmem:[%s172 + $0x78] sm:$0xff] %v340
      %s357 = smul.u32 16, %s14
      %p358 = scmp.lt.s32.totalorder %s357, 31
      %s359 = scalar_select %p358, %s357, 31
      %s360 = smul.addr %s359, 8
      %s361 = scalar_lea.vmem %s3, %s360
      // Predicated region
      $region33: #{fagcn_forward.4} parent=31 // pred_check
        %p362 = pneg %p100
      $region34: #{fagcn_forward.4} parent=31 // pred_check_branch
        %364 = sbr.rel (%p362) target = $region36
      $region35: #{fagcn_forward.4} parent=31 // pred_region
        %s365 = smul.u32 16, %s14
      $region36: #{fagcn_forward.4} parent=31 // pred_fallthru
        _
    $region32: #{fagcn_forward.4} parent=5 // pred_fallthru
      _
    %p366 = scmp.le.s32.totalorder 2, %s9
    // Predicated region
    $region37: #{fagcn_forward.4} parent=5 // pred_check
      %p367 = pneg %p366
    $region38: #{fagcn_forward.4} parent=5 // pred_check_branch
      %369 = sbr.rel (%p367) target = $region40
    $region39: #{fagcn_forward.4} parent=5 // pred_region
      %s370 = ssub.s32 %s9, 2
      // Predicated region
      $region41: #{fagcn_forward.4} parent=39 // pred_check
        %p371 = pneg %p106
      $region42: #{fagcn_forward.4} parent=39 // pred_check_branch
        %373 = sbr.rel (%p371) target = $region44
      $region43: #{fagcn_forward.4} parent=39 // pred_region
        %s374 = smul.u32 16, %s15
        %p375 = scmp.lt.s32.totalorder %s374, 31
        %s376 = scalar_select %p375, %s374, 31
        %s377 = smul.addr %s376, 8
        %s378 = scalar_lea.vmem %s3, %s377
      $region44: #{fagcn_forward.4} parent=39 // pred_fallthru
        _
    $region40: #{fagcn_forward.4} parent=5 // pred_fallthru
      _
  $region6: #{fagcn_forward.4} parent=0 // loop_footer
    %s13 = sadd.s32 1, %s9
  $region7: #{fagcn_forward.4} parent=0 // loop_footer_branch
    %8 = sbr.rel target = $region3
  $region8: #{fagcn_forward.4} parent=0 // loop_exit
    _

// kernel: fagcn_forward.5
$region0: #{fagcn_forward.5}
  #allocation0 [shape = 'u32[]', space=smem, size = 0x4, offset = 0x4, fixed_abs, tag = 'smem constant byte address 0x4 - core index']
  #allocation1 [shape = 'u32[72,128]{1,0:T(1,128)}', space=vmem, size = 0x9000, scoped, tag = 'internal scratch']
  #allocation2 [shape = 'f32[1,1]{1,0:T(1,128)S(1)}', space=vmem, size = 0x200, scoped, tag = 'scoped memory for fagcn_forward.5']
  %s0 = inlined_call_operand.vmem [shape: bf16[256,256], index: 0, kind: input, shape index: {}]
  %s1 = inlined_call_operand.vmem [shape: bf16[256,128], index: 1, kind: input, shape index: {}]
  %s2 = inlined_call_operand.vmem [shape: f32[256,1], index: 2, kind: input, shape index: {}]
  %s3 = inlined_call_operand.vmem [shape: f32[1,256], index: 3, kind: input, shape index: {}]
  %s4 = inlined_call_operand.<no memory space> [shape: f32[1,1], index: 4, kind: input, shape index: {}]
  %s5 = inlined_call_operand.vmem [shape: f32[256,128], index: 5, kind: input, shape index: {}]
  %s6 = inlined_call_operand.vmem [shape: f32[256,128], index: 6, kind: output, shape index: {}]
  %s7 = sld [smem:[#allocation0]]
  $region102: #{fagcn_forward.5} parent=0
    _
  %s9 = ssub.s32 1, %s7
  %s10 = scalar_select 0, %s9, %s7
  %v11 = vstv %s4
  %12 = vst [vmem:[#allocation2] sm:$0x1] %v11
  $region1: #{fagcn_forward.5} parent=0
    #allocation3 [shape = 'u8[65536]{0}', space=vmem, size = 0x10000, scoped, tag = 'input window, operand 0']
    loop: start=0, step=1, limit=6
    $region2: #{fagcn_forward.5} parent=1 // loop_pre_header
      _
    $region3: #{fagcn_forward.5} parent=1 // loop_header
      %s14 = sphi 0, %s18
      %p15 = scmp.ge.s32.totalorder %s14, 6
      %s21 = sphi 0, %s33
      %s22 = sphi 0, %s29
      %s23 = sphi 0, %s21
      %s24 = sphi 0, %s22
      %s25 = sphi 0, %s23
      %s26 = sphi 0, %s24
      %s38 = sphi 0, %s40
      %s41 = sphi 0, %s38
      %s42 = sphi 0, %s41
      %s58 = sphi 0, %s42
      %s64 = sphi 0, %s66
      %s67 = sphi 0, %s64
      %s68 = sphi 0, %s67
      %s84 = sphi 0, %s68
      %s90 = sphi 0, %s92
      %s93 = sphi 0, %s90
      %s94 = sphi 0, %s93
      %s110 = sphi 0, %s94
      %s116 = sphi 0, %s118
      %s119 = sphi 0, %s116
      %s120 = sphi 0, %s119
      %s136 = sphi 0, %s120
      %s140 = sphi 0, %s140
      %s142 = sphi 0, %s140
      %s143 = sphi 0, %s142
      %s157 = sphi 0, %s143
      %s163 = sphi 0, %s165
      %s166 = sphi 0, %s163
      %s167 = sphi 0, %s166
      %s183 = sphi 0, %s167
      %s189 = sphi 0, %s191
      %s192 = sphi 0, %s189
      %s193 = sphi 0, %s192
      %s209 = sphi 0, %s193
    $region4: #{fagcn_forward.5} parent=1 // loop_header_branch
      %17 = sbr.rel (%p15) target = $region8
    $region5: #{fagcn_forward.5} parent=1 // loop_body
      %s19 = ssub.s32 %s14, 1
      %s20 = ssub.s32 %s14, 2
      %s27 = sadd.s32 1, %s22
      %p28 = scmp.ge.s32.totalorder %s27, 2
      %s29 = scalar_select %p28, 0, %s27
      %s30 = sadd.s32 1, %s21
      %s31 = scalar_select %p28, %s30, %s21
      %p32 = scmp.ge.s32.totalorder %s31, 2
      %s33 = scalar_select %p32, 0, %s31
      %s34 = ssub.s32 %s21, %s33
      %s35 = ssub.s32 %s22, %s29
      %s36 = sor.u32 %s34, %s35
      %p37 = scmp.eq.s32.totalorder %s36, 0
      %s39 = sadd.s32 %s38, 1
      %s40 = scalar_select %p37, %s38, %s39
      %p43 = pneg %p37
      %p44 = scmp.eq.s32.totalorder %s14, 3
      %p45 = por %p43, %p44
      %p46 = scmp.ne.s32.totalorder %s38, %s41
      %p47 = scmp.eq.s32.totalorder %s14, 0
      %p48 = por %p46, %p47
      %p49 = scmp.ne.s32.totalorder %s38, %s41
      %p50 = scmp.eq.s32.totalorder %s19, 3
      %p51 = por %p49, %p50
      %p52 = scmp.ne.s32.totalorder %s41, %s42
      %p53 = scmp.eq.s32.totalorder %s19, 0
      %p54 = por %p52, %p53
      %p55 = scmp.ne.s32.totalorder %s41, %s42
      %p56 = scmp.eq.s32.totalorder %s20, 3
      %p57 = por %p55, %p56
      %p59 = scmp.ne.s32.totalorder %s42, %s58
      %p60 = scmp.eq.s32.totalorder %s20, 0
      %p61 = por %p59, %p60
      %s62 = ssub.s32 %s22, %s29
      %p63 = scmp.eq.s32.totalorder %s62, 0
      %s65 = sadd.s32 %s64, 1
      %s66 = scalar_select %p63, %s64, %s65
      %p69 = pneg %p63
      %p70 = scmp.eq.s32.totalorder %s14, 3
      %p71 = por %p69, %p70
      %p72 = scmp.ne.s32.totalorder %s64, %s67
      %p73 = scmp.eq.s32.totalorder %s14, 0
      %p74 = por %p72, %p73
      %p75 = scmp.ne.s32.totalorder %s64, %s67
      %p76 = scmp.eq.s32.totalorder %s19, 3
      %p77 = por %p75, %p76
      %p78 = scmp.ne.s32.totalorder %s67, %s68
      %p79 = scmp.eq.s32.totalorder %s19, 0
      %p80 = por %p78, %p79
      %p81 = scmp.ne.s32.totalorder %s67, %s68
      %p82 = scmp.eq.s32.totalorder %s20, 3
      %p83 = por %p81, %p82
      %p85 = scmp.ne.s32.totalorder %s68, %s84
      %p86 = scmp.eq.s32.totalorder %s20, 0
      %p87 = por %p85, %p86
      %s88 = ssub.s32 %s21, %s33
      %p89 = scmp.eq.s32.totalorder %s88, 0
      %s91 = sadd.s32 %s90, 1
      %s92 = scalar_select %p89, %s90, %s91
      %p95 = pneg %p89
      %p96 = scmp.eq.s32.totalorder %s14, 3
      %p97 = por %p95, %p96
      %p98 = scmp.ne.s32.totalorder %s90, %s93
      %p99 = scmp.eq.s32.totalorder %s14, 0
      %p100 = por %p98, %p99
      %p101 = scmp.ne.s32.totalorder %s90, %s93
      %p102 = scmp.eq.s32.totalorder %s19, 3
      %p103 = por %p101, %p102
      %p104 = scmp.ne.s32.totalorder %s93, %s94
      %p105 = scmp.eq.s32.totalorder %s19, 0
      %p106 = por %p104, %p105
      %p107 = scmp.ne.s32.totalorder %s93, %s94
      %p108 = scmp.eq.s32.totalorder %s20, 3
      %p109 = por %p107, %p108
      %p111 = scmp.ne.s32.totalorder %s94, %s110
      %p112 = scmp.eq.s32.totalorder %s20, 0
      %p113 = por %p111, %p112
      %s114 = ssub.s32 %s22, %s29
      %p115 = scmp.eq.s32.totalorder %s114, 0
      %s117 = sadd.s32 %s116, 1
      %s118 = scalar_select %p115, %s116, %s117
      %p121 = pneg %p115
      %p122 = scmp.eq.s32.totalorder %s14, 3
      %p123 = por %p121, %p122
      %p124 = scmp.ne.s32.totalorder %s116, %s119
      %p125 = scmp.eq.s32.totalorder %s14, 0
      %p126 = por %p124, %p125
      %p127 = scmp.ne.s32.totalorder %s116, %s119
      %p128 = scmp.eq.s32.totalorder %s19, 3
      %p129 = por %p127, %p128
      %p130 = scmp.ne.s32.totalorder %s119, %s120
      %p131 = scmp.eq.s32.totalorder %s19, 0
      %p132 = por %p130, %p131
      %p133 = scmp.ne.s32.totalorder %s119, %s120
      %p134 = scmp.eq.s32.totalorder %s20, 3
      %p135 = por %p133, %p134
      %p137 = scmp.ne.s32.totalorder %s120, %s136
      %p138 = scmp.eq.s32.totalorder %s20, 0
      %p139 = por %p137, %p138
      %s141 = sadd.s32 %s140, 1
      %p144 = scmp.eq.s32.totalorder %s14, 3
      %p145 = scmp.ne.s32.totalorder %s140, %s142
      %p146 = scmp.eq.s32.totalorder %s14, 0
      %p147 = por %p145, %p146
      %p148 = scmp.ne.s32.totalorder %s140, %s142
      %p149 = scmp.eq.s32.totalorder %s19, 3
      %p150 = por %p148, %p149
      %p151 = scmp.ne.s32.totalorder %s142, %s143
      %p152 = scmp.eq.s32.totalorder %s19, 0
      %p153 = por %p151, %p152
      %p154 = scmp.ne.s32.totalorder %s142, %s143
      %p155 = scmp.eq.s32.totalorder %s20, 3
      %p156 = por %p154, %p155
      %p158 = scmp.ne.s32.totalorder %s143, %s157
      %p159 = scmp.eq.s32.totalorder %s20, 0
      %p160 = por %p158, %p159
      %s161 = ssub.s32 %s21, %s33
      %p162 = scmp.eq.s32.totalorder %s161, 0
      %s164 = sadd.s32 %s163, 1
      %s165 = scalar_select %p162, %s163, %s164
      %p168 = pneg %p162
      %p169 = scmp.eq.s32.totalorder %s14, 3
      %p170 = por %p168, %p169
      %p171 = scmp.ne.s32.totalorder %s163, %s166
      %p172 = scmp.eq.s32.totalorder %s14, 0
      %p173 = por %p171, %p172
      %p174 = scmp.ne.s32.totalorder %s163, %s166
      %p175 = scmp.eq.s32.totalorder %s19, 3
      %p176 = por %p174, %p175
      %p177 = scmp.ne.s32.totalorder %s166, %s167
      %p178 = scmp.eq.s32.totalorder %s19, 0
      %p179 = por %p177, %p178
      %p180 = scmp.ne.s32.totalorder %s166, %s167
      %p181 = scmp.eq.s32.totalorder %s20, 3
      %p182 = por %p180, %p181
      %p184 = scmp.ne.s32.totalorder %s167, %s183
      %p185 = scmp.eq.s32.totalorder %s20, 0
      %p186 = por %p184, %p185
      %s187 = ssub.s32 %s21, %s33
      %p188 = scmp.eq.s32.totalorder %s187, 0
      %s190 = sadd.s32 %s189, 1
      %s191 = scalar_select %p188, %s189, %s190
      %p194 = pneg %p188
      %p195 = scmp.eq.s32.totalorder %s14, 3
      %p196 = por %p194, %p195
      %p197 = scmp.ne.s32.totalorder %s189, %s192
      %p198 = scmp.eq.s32.totalorder %s14, 0
      %p199 = por %p197, %p198
      %p200 = scmp.ne.s32.totalorder %s189, %s192
      %p201 = scmp.eq.s32.totalorder %s19, 3
      %p202 = por %p200, %p201
      %p203 = scmp.ne.s32.totalorder %s192, %s193
      %p204 = scmp.eq.s32.totalorder %s19, 0
      %p205 = por %p203, %p204
      %p206 = scmp.ne.s32.totalorder %s192, %s193
      %p207 = scmp.eq.s32.totalorder %s20, 3
      %p208 = por %p206, %p207
      %p210 = scmp.ne.s32.totalorder %s193, %s209
      %p211 = scmp.eq.s32.totalorder %s20, 0
      %p212 = por %p210, %p211
      %p213 = scmp.le.s32.totalorder 1, %s14
      %p214 = scmp.lt.s32.totalorder %s14, 5
      %p215 = pnand %p213, %p214
      %p216 = pneg %p215
      // Predicated region
      $region9: #{fagcn_forward.5} parent=5 // pred_check
        _
      $region10: #{fagcn_forward.5} parent=5 // pred_check_branch
        %218 = sbr.rel (%p215) target = $region12
      $region11: #{fagcn_forward.5} parent=5 // pred_region
        %s219 = ssub.s32 %s14, 1
        // Predicated region
        $region13: #{fagcn_forward.5} parent=11 // pred_check
          %p220 = pneg %p153
        $region14: #{fagcn_forward.5} parent=11 // pred_check_branch
          %222 = sbr.rel (%p220) target = $region16
        $region15: #{fagcn_forward.5} parent=11 // pred_region
          _
        $region16: #{fagcn_forward.5} parent=11 // pred_fallthru
          _
      $region12: #{fagcn_forward.5} parent=5 // pred_fallthru
        _
      %p223 = scmp.lt.s32.totalorder %s14, 4
      // Predicated region
      $region17: #{fagcn_forward.5} parent=5 // pred_check
        %p224 = pneg %p223
      $region18: #{fagcn_forward.5} parent=5 // pred_check_branch
        %226 = sbr.rel (%p224) target = $region20
      $region19: #{fagcn_forward.5} parent=5 // pred_region
        // Predicated region
        $region21: #{fagcn_forward.5} parent=19 // pred_check
          %p227 = pneg %p48
        $region22: #{fagcn_forward.5} parent=19 // pred_check_branch
          %229 = sbr.rel (%p227) target = $region24
        $region23: #{fagcn_forward.5} parent=19 // pred_region
          %s230 = sand.u32 %s38, 1
          %s231 = sand.u32 %s38, 1
          %s232 = smul.addr %s231, 64
          %s233 = scalar_lea.vmem [#allocation3], %s232
          %s234 = smul.u32 16, %s21
          %s235 = smul.addr %s234, 2
          %s236 = sadd.s32 %s22, %s235
          %s237 = smul.addr %s236, 4
          %s238 = scalar_lea.vmem %s0, %s237
          // Predicated region
          $region25: #{fagcn_forward.5} parent=23 // pred_check
            _
          $region26: #{fagcn_forward.5} parent=23 // pred_check_branch
            %240 = sbr.rel (0) target = $region28
          $region27: #{fagcn_forward.5} parent=23 // pred_region
            // Predicated region
            $region29: #{fagcn_forward.5} parent=27 // pred_check
              _
            $region30: #{fagcn_forward.5} parent=27 // pred_check_branch
              %242 = sbr.rel target = $region32
            $region31: #{fagcn_forward.5} parent=27 // pred_region
              // Predicated region
              $region44: #{fagcn_forward.5} parent=31 // pred_check
                _
              $region45: #{fagcn_forward.5} parent=31 // pred_check_branch
                %288 = sbr.rel (0) target = $region47
              $region46: #{fagcn_forward.5} parent=31 // pred_region
                loop: start=0, step=1, limit=1
                $region48: #{fagcn_forward.5} parent=46 // loop_pre_header
                  _
                $region49: #{fagcn_forward.5} parent=46 // loop_header
                  %s290 = sphi 0, %s294
                  %p291 = scmp.ge.s32.totalorder %s290, 1
                  %s295 = sphi %s238, %s238
                  %s296 = sphi %s233, %s233
                $region50: #{fagcn_forward.5} parent=46 // loop_header_branch
                  %293 = sbr.rel (%p291) target = $region54
                $region51: #{fagcn_forward.5} parent=46 // loop_body
                  _
                $region52: #{fagcn_forward.5} parent=46 // loop_footer
                  %s294 = sadd.s32 1, %s290
                $region53: #{fagcn_forward.5} parent=46 // loop_footer_branch
                  %289 = sbr.rel target = $region49
                $region54: #{fagcn_forward.5} parent=46 // loop_exit
                  _
                %s298 = ssub.s32 16, 1
                loop: start=0, step=1, limit=1
                $region55: #{fagcn_forward.5} parent=46 // loop_pre_header
                  _
                $region56: #{fagcn_forward.5} parent=46 // loop_header
                  %s300 = sphi 0, %s304
                  %p301 = scmp.ge.s32.totalorder %s300, 1
                  %s305 = sphi %s238, %s238
                  %s306 = sphi %s233, %s233
                $region57: #{fagcn_forward.5} parent=46 // loop_header_branch
                  %303 = sbr.rel (%p301) target = $region61
                $region58: #{fagcn_forward.5} parent=46 // loop_body
                  %v307 = vld [vmem:[%s305] sm:%s298]
                  %308 = vst [vmem:[%s306] sm:%s298] %v307
                  %v309 = vld [vmem:[%s305 + $0x8] sm:%s298]
                  %310 = vst [vmem:[%s306 + $0x4] sm:%s298] %v309
                  %v311 = vld [vmem:[%s305 + $0x10] sm:%s298]
                  %312 = vst [vmem:[%s306 + $0x8] sm:%s298] %v311
                  %v313 = vld [vmem:[%s305 + $0x18] sm:%s298]
                  %314 = vst [vmem:[%s306 + $0xc] sm:%s298] %v313
                  %v315 = vld [vmem:[%s305 + $0x20] sm:%s298]
                  %316 = vst [vmem:[%s306 + $0x10] sm:%s298] %v315
                  %v317 = vld [vmem:[%s305 + $0x28] sm:%s298]
                  %318 = vst [vmem:[%s306 + $0x14] sm:%s298] %v317
                  %v319 = vld [vmem:[%s305 + $0x30] sm:%s298]
                  %320 = vst [vmem:[%s306 + $0x18] sm:%s298] %v319
                  %v321 = vld [vmem:[%s305 + $0x38] sm:%s298]
                  %322 = vst [vmem:[%s306 + $0x1c] sm:%s298] %v321
                  %v323 = vld [vmem:[%s305 + $0x40] sm:%s298]
                  %324 = vst [vmem:[%s306 + $0x20] sm:%s298] %v323
                  %v325 = vld [vmem:[%s305 + $0x48] sm:%s298]
                  %326 = vst [vmem:[%s306 + $0x24] sm:%s298] %v325
                  %v327 = vld [vmem:[%s305 + $0x50] sm:%s298]
                  %328 = vst [vmem:[%s306 + $0x28] sm:%s298] %v327
                  %v329 = vld [vmem:[%s305 + $0x58] sm:%s298]
                  %330 = vst [vmem:[%s306 + $0x2c] sm:%s298] %v329
                  %v331 = vld [vmem:[%s305 + $0x60] sm:%s298]
                  %332 = vst [vmem:[%s306 + $0x30] sm:%s298] %v331
                  %v333 = vld [vmem:[%s305 + $0x68] sm:%s298]
                  %334 = vst [vmem:[%s306 + $0x34] sm:%s298] %v333
                  %v335 = vld [vmem:[%s305 + $0x70] sm:%s298]
                  %336 = vst [vmem:[%s306 + $0x38] sm:%s298] %v335
                  %v337 = vld [vmem:[%s305 + $0x78] sm:%s298]
                  %338 = vst [vmem:[%s306 + $0x3c] sm:%s298] %v337
                $region59: #{fagcn_forward.5} parent=46 // loop_footer
                  %s304 = sadd.s32 1, %s300
                $region60: #{fagcn_forward.5} parent=46 // loop_footer_branch
                  %299 = sbr.rel target = $region56
                $region61: #{fagcn_forward.5} parent=46 // loop_exit
                  _
              $region47: #{fagcn_forward.5} parent=31 // pred_fallthru
                _
            $region32: #{fagcn_forward.5} parent=27 // pred_fallthru
              _
            // Predicated region
            $region33: #{fagcn_forward.5} parent=27 // pred_check
              _
            $region34: #{fagcn_forward.5} parent=27 // pred_check_branch
              %244 = sbr.rel (0) target = $region36
            $region35: #{fagcn_forward.5} parent=27 // pred_region
              %s246 = ssub.s32 16, 1
              loop: start=0, step=1, limit=1
              $region37: #{fagcn_forward.5} parent=35 // loop_pre_header
                _
              $region38: #{fagcn_forward.5} parent=35 // loop_header
                %s248 = sphi 0, %s252
                %p249 = scmp.ge.s32.totalorder %s248, 1
                %s253 = sphi %s238, %s238
                %s254 = sphi %s233, %s233
              $region39: #{fagcn_forward.5} parent=35 // loop_header_branch
                %251 = sbr.rel (%p249) target = $region43
              $region40: #{fagcn_forward.5} parent=35 // loop_body
                %v255 = vld [vmem:[%s253] sm:%s246]
                %256 = vst [vmem:[%s254] sm:%s246] %v255
                %v257 = vld [vmem:[%s253 + $0x8] sm:%s246]
                %258 = vst [vmem:[%s254 + $0x4] sm:%s246] %v257
                %v259 = vld [vmem:[%s253 + $0x10] sm:%s246]
                %260 = vst [vmem:[%s254 + $0x8] sm:%s246] %v259
                %v261 = vld [vmem:[%s253 + $0x18] sm:%s246]
                %262 = vst [vmem:[%s254 + $0xc] sm:%s246] %v261
                %v263 = vld [vmem:[%s253 + $0x20] sm:%s246]
                %264 = vst [vmem:[%s254 + $0x10] sm:%s246] %v263
                %v265 = vld [vmem:[%s253 + $0x28] sm:%s246]
                %266 = vst [vmem:[%s254 + $0x14] sm:%s246] %v265
                %v267 = vld [vmem:[%s253 + $0x30] sm:%s246]
                %268 = vst [vmem:[%s254 + $0x18] sm:%s246] %v267
                %v269 = vld [vmem:[%s253 + $0x38] sm:%s246]
                %270 = vst [vmem:[%s254 + $0x1c] sm:%s246] %v269
                %v271 = vld [vmem:[%s253 + $0x40] sm:%s246]
                %272 = vst [vmem:[%s254 + $0x20] sm:%s246] %v271
                %v273 = vld [vmem:[%s253 + $0x48] sm:%s246]
                %274 = vst [vmem:[%s254 + $0x24] sm:%s246] %v273
                %v275 = vld [vmem:[%s253 + $0x50] sm:%s246]
                %276 = vst [vmem:[%s254 + $0x28] sm:%s246] %v275
                %v277 = vld [vmem:[%s253 + $0x58] sm:%s246]
                %278 = vst [vmem:[%s254 + $0x2c] sm:%s246] %v277
                %v279 = vld [vmem:[%s253 + $0x60] sm:%s246]
                %280 = vst [vmem:[%s254 + $0x30] sm:%s246] %v279
                %v281 = vld [vmem:[%s253 + $0x68] sm:%s246]
                %282 = vst [vmem:[%s254 + $0x34] sm:%s246] %v281
                %v283 = vld [vmem:[%s253 + $0x70] sm:%s246]
                %284 = vst [vmem:[%s254 + $0x38] sm:%s246] %v283
                %v285 = vld [vmem:[%s253 + $0x78] sm:%s246]
                %286 = vst [vmem:[%s254 + $0x3c] sm:%s246] %v285
              $region41: #{fagcn_forward.5} parent=35 // loop_footer
                %s252 = sadd.s32 1, %s248
              $region42: #{fagcn_forward.5} parent=35 // loop_footer_branch
                %247 = sbr.rel target = $region38
              $region43: #{fagcn_forward.5} parent=35 // loop_exit
                _
            $region36: #{fagcn_forward.5} parent=27 // pred_fallthru
              _
          $region28: #{fagcn_forward.5} parent=23 // pred_fallthru
            _
          %339 = vnop
        $region24: #{fagcn_forward.5} parent=19 // pred_fallthru
          _
        // Predicated region
        $region62: #{fagcn_forward.5} parent=19 // pred_check
          %p340 = pneg %p74
        $region63: #{fagcn_forward.5} parent=19 // pred_check_branch
          %342 = sbr.rel (%p340) target = $region65
        $region64: #{fagcn_forward.5} parent=19 // pred_region
          %s343 = smul.u32 16, %s22
          %p344 = scmp.lt.s32.totalorder %s343, 31
          %s345 = scalar_select %p344, %s343, 31
          %s346 = smul.addr %s345, 4
          %s347 = scalar_lea.vmem %s1, %s346
          %s348 = smul.u32 16, %s22
        $region65: #{fagcn_forward.5} parent=19 // pred_fallthru
          _
        // Predicated region
        $region66: #{fagcn_forward.5} parent=19 // pred_check
          %p349 = pneg %p100
        $region67: #{fagcn_forward.5} parent=19 // pred_check_branch
          %351 = sbr.rel (%p349) target = $region69
        $region68: #{fagcn_forward.5} parent=19 // pred_region
          %s352 = smul.u32 16, %s21
          %p353 = scmp.lt.s32.totalorder %s352, 31
          %s354 = scalar_select %p353, %s352, 31
          %s355 = smul.addr %s354, 8
          %s356 = scalar_lea.vmem %s2, %s355
          %s357 = smul.u32 16, %s21
        $region69: #{fagcn_forward.5} parent=19 // pred_fallthru
          _
        // Predicated region
        $region70: #{fagcn_forward.5} parent=19 // pred_check
          %p358 = pneg %p126
        $region71: #{fagcn_forward.5} parent=19 // pred_check_branch
          %360 = sbr.rel (%p358) target = $region73
        $region72: #{fagcn_forward.5} parent=19 // pred_region
          %p361 = scmp.lt.s32.totalorder %s22, 1
          %s362 = scalar_select %p361, %s22, 1
          %s363 = scalar_lea.vmem %s3, %s362
        $region73: #{fagcn_forward.5} parent=19 // pred_fallthru
          _
        // Predicated region
        $region74: #{fagcn_forward.5} parent=19 // pred_check
          %p364 = pneg %p173
        $region75: #{fagcn_forward.5} parent=19 // pred_check_branch
          %366 = sbr.rel (%p364) target = $region77
        $region76: #{fagcn_forward.5} parent=19 // pred_region
          %s367 = smul.u32 16, %s21
          %p368 = scmp.lt.s32.totalorder %s367, 31
          %s369 = scalar_select %p368, %s367, 31
          %s370 = smul.addr %s369, 8
          %s371 = scalar_lea.vmem %s5, %s370
          %s372 = smul.u32 16, %s21
        $region77: #{fagcn_forward.5} parent=19 // pred_fallthru
          _
      $region20: #{fagcn_forward.5} parent=5 // pred_fallthru
        _
      %p373 = scmp.le.s32.totalorder 1, %s14
      %p374 = scmp.lt.s32.totalorder %s14, 5
      %p375 = pnand %p373, %p374
      %p376 = pneg %p375
      // Predicated region
      $region78: #{fagcn_forward.5} parent=5 // pred_check
        _
      $region79: #{fagcn_forward.5} parent=5 // pred_check_branch
        %378 = sbr.rel (%p375) target = $region81
      $region80: #{fagcn_forward.5} parent=5 // pred_region
        %s379 = ssub.s32 %s14, 1
        %s380 = sand.u32 %s41, 1
        %s381 = sand.u32 %s41, 1
        %s382 = smul.addr %s381, 64
        %s383 = scalar_lea.vmem [#allocation3], %s382
        // Predicated region
        $region82: #{fagcn_forward.5} parent=80 // pred_check
          %p384 = pneg %p54
        $region83: #{fagcn_forward.5} parent=80 // pred_check_branch
          %386 = sbr.rel (%p384) target = $region85
        $region84: #{fagcn_forward.5} parent=80 // pred_region
          _
        $region85: #{fagcn_forward.5} parent=80 // pred_fallthru
          _
        %s387 = sand.u32 %s41, 1
        %s388 = sand.u32 %s41, 1
        %s389 = smul.addr %s388, 64
        %s390 = scalar_lea.vmem [#allocation3], %s389
        %p391 = pneg %p54
        %p392 = pneg %p51
        %s393 = smul.u32 16, %s24
        %p394 = scmp.lt.s32.totalorder %s393, 31
        %s395 = scalar_select %p394, %s393, 31
        %s396 = smul.addr %s395, 4
        %s397 = scalar_lea.vmem %s1, %s396
        %p398 = pneg %p80
        %p399 = pneg %p77
        %s400 = smul.u32 16, %s23
        %p401 = scmp.lt.s32.totalorder %s400, 31
        %s402 = scalar_select %p401, %s400, 31
        %s403 = smul.addr %s402, 8
        %s404 = scalar_lea.vmem %s2, %s403
        %p405 = pneg %p106
        %p406 = pneg %p103
        %p407 = scmp.lt.s32.totalorder %s24, 1
        %s408 = scalar_select %p407, %s24, 1
        %s409 = scalar_lea.vmem %s3, %s408
        %p410 = pneg %p132
        %p411 = pneg %p129
        %p412 = pneg %p153
        %p413 = pneg %p150
        %s414 = smul.u32 16, %s23
        %p415 = scmp.lt.s32.totalorder %s414, 31
        %s416 = scalar_select %p415, %s414, 31
        %s417 = smul.addr %s416, 8
        %s418 = scalar_lea.vmem %s5, %s417
        %p419 = pneg %p179
        %p420 = pneg %p176
        %p421 = pneg %p205
        %p422 = pneg %p202
        %s423 = smul.u32 16, %s23
        %p424 = scmp.lt.s32.totalorder %s423, 31
        %s425 = scalar_select %p424, %s423, 31
        %s426 = smul.addr %s425, 8
        %s427 = scalar_lea.vmem %s6, %s426
        %s428 = smul.u32 16, %s23
        %s429 = smul.u32 16, %s24
        %p430 = scmp.lt.s32.totalorder %s429, 31
        %s431 = scalar_select %p430, %s429, 31
        %s432 = smul.addr %s431, 4
        %s433 = scalar_lea.vmem %s1, %s432
        %s434 = smul.u32 16, %s24
        %s435 = smul.u32 16, %s23
        %p436 = scmp.lt.s32.totalorder %s435, 31
        %s437 = scalar_select %p436, %s435, 31
        %s438 = smul.addr %s437, 8
        %s439 = scalar_lea.vmem %s2, %s438
        %s440 = smul.u32 16, %s23
        %p441 = scmp.lt.s32.totalorder %s24, 1
        %s442 = scalar_select %p441, %s24, 1
        %s443 = scalar_lea.vmem %s3, %s442
        %s444 = smul.u32 16, %s23
        %p445 = scmp.lt.s32.totalorder %s444, 31
        %s446 = scalar_select %p445, %s444, 31
        %s447 = smul.addr %s446, 8
        %s448 = scalar_lea.vmem %s5, %s447
        %s449 = smul.u32 16, %s23
        %s450 = smul.u32 16, %s23
        %p451 = scmp.lt.s32.totalorder %s450, 31
        %s452 = scalar_select %p451, %s450, 31
        %s453 = smul.addr %s452, 8
        %s454 = scalar_lea.vmem %s6, %s453
        %s455 = smul.u32 16, %s23
        %p456 = scmp.eq.s32.totalorder %s24, 0
        // Predicated region
        $region86: #{fagcn_forward.5} parent=80 // pred_check
          %p457 = pneg %p456
        $region87: #{fagcn_forward.5} parent=80 // pred_check_branch
          %459 = sbr.rel (%p457) target = $region89
        $region88: #{fagcn_forward.5} parent=80 // pred_region
          %v460 = vld [vmem:[%s448] sm:$0xff]
          %v461 = vld [vmem:[%s448 + $0x8] sm:$0xff]
          %v462 = vld [vmem:[%s448 + $0x10] sm:$0xff]
          %v463 = vld [vmem:[%s448 + $0x18] sm:$0xff]
          %v464 = vld [vmem:[%s448 + $0x20] sm:$0xff]
          %v465 = vld [vmem:[%s448 + $0x28] sm:$0xff]
          %v466 = vld [vmem:[%s448 + $0x30] sm:$0xff]
          %v467 = vld [vmem:[%s448 + $0x38] sm:$0xff]
          %v468 = vld [vmem:[%s448 + $0x40] sm:$0xff]
          %v469 = vld [vmem:[%s448 + $0x48] sm:$0xff]
          %v470 = vld [vmem:[%s448 + $0x50] sm:$0xff]
          %v471 = vld [vmem:[%s448 + $0x58] sm:$0xff]
          %v472 = vld [vmem:[%s448 + $0x60] sm:$0xff]
          %v473 = vld [vmem:[%s448 + $0x68] sm:$0xff]
          %v474 = vld [vmem:[%s448 + $0x70] sm:$0xff]
          %v475 = vld [vmem:[%s448 + $0x78] sm:$0xff]
          %v476 = vmul.f32 %v460, 0.3
          %v477 = vmul.f32 %v461, 0.3
          %v478 = vmul.f32 %v462, 0.3
          %v479 = vmul.f32 %v463, 0.3
          %v480 = vmul.f32 %v464, 0.3
          %v481 = vmul.f32 %v465, 0.3
          %v482 = vmul.f32 %v466, 0.3
          %v483 = vmul.f32 %v467, 0.3
          %v484 = vmul.f32 %v468, 0.3
          %v485 = vmul.f32 %v469, 0.3
          %v486 = vmul.f32 %v470, 0.3
          %v487 = vmul.f32 %v471, 0.3
          %v488 = vmul.f32 %v472, 0.3
          %v489 = vmul.f32 %v473, 0.3
          %v490 = vmul.f32 %v474, 0.3
          %v491 = vmul.f32 %v475, 0.3
          %492 = vst [vmem:[%s454] sm:$0xff] %v476
          %493 = vst [vmem:[%s454 + $0x8] sm:$0xff] %v477
          %494 = vst [vmem:[%s454 + $0x10] sm:$0xff] %v478
          %495 = vst [vmem:[%s454 + $0x18] sm:$0xff] %v479
          %496 = vst [vmem:[%s454 + $0x20] sm:$0xff] %v480
          %497 = vst [vmem:[%s454 + $0x28] sm:$0xff] %v481
          %498 = vst [vmem:[%s454 + $0x30] sm:$0xff] %v482
          %499 = vst [vmem:[%s454 + $0x38] sm:$0xff] %v483
          %500 = vst [vmem:[%s454 + $0x40] sm:$0xff] %v484
          %501 = vst [vmem:[%s454 + $0x48] sm:$0xff] %v485
          %502 = vst [vmem:[%s454 + $0x50] sm:$0xff] %v486
          %503 = vst [vmem:[%s454 + $0x58] sm:$0xff] %v487
          %504 = vst [vmem:[%s454 + $0x60] sm:$0xff] %v488
          %505 = vst [vmem:[%s454 + $0x68] sm:$0xff] %v489
          %506 = vst [vmem:[%s454 + $0x70] sm:$0xff] %v490
          %507 = vst [vmem:[%s454 + $0x78] sm:$0xff] %v491
        $region89: #{fagcn_forward.5} parent=80 // pred_fallthru
          _
        %v508 = vld [vmem:[%s439] sm:$0xff]
        %v509 = vld [vmem:[%s439 + $0x8] sm:$0xff]
        %v510 = vld [vmem:[%s439 + $0x10] sm:$0xff]
        %v511 = vld [vmem:[%s439 + $0x18] sm:$0xff]
        %v512 = vld [vmem:[%s439 + $0x20] sm:$0xff]
        %v513 = vld [vmem:[%s439 + $0x28] sm:$0xff]
        %v514 = vld [vmem:[%s439 + $0x30] sm:$0xff]
        %v515 = vld [vmem:[%s439 + $0x38] sm:$0xff]
        %v516 = vld [vmem:[%s439 + $0x40] sm:$0xff]
        %v517 = vld [vmem:[%s439 + $0x48] sm:$0xff]
        %v518 = vld [vmem:[%s439 + $0x50] sm:$0xff]
        %v519 = vld [vmem:[%s439 + $0x58] sm:$0xff]
        %v520 = vld [vmem:[%s439 + $0x60] sm:$0xff]
        %v521 = vld [vmem:[%s439 + $0x68] sm:$0xff]
        %v522 = vld [vmem:[%s439 + $0x70] sm:$0xff]
        %v523 = vld [vmem:[%s439 + $0x78] sm:$0xff]
        %v524 = vld [vmem:[%s443] sm:$0x1]
        %526 = vset.pattern.permute.xlu0 0
        %527 = vperm.xlu0 %526, %v508
        %v528 = vpop.permute.xlu0 %527
        %531 = vset.pattern.permute.xlu0 0
        %532 = vperm.xlu0 %531, %v509
        %v533 = vpop.permute.xlu0 %532
        %536 = vset.pattern.permute.xlu0 0
        %537 = vperm.xlu0 %536, %v510
        %v538 = vpop.permute.xlu0 %537
        %541 = vset.pattern.permute.xlu0 0
        %542 = vperm.xlu0 %541, %v511
        %v543 = vpop.permute.xlu0 %542
        %546 = vset.pattern.permute.xlu0 0
        %547 = vperm.xlu0 %546, %v512
        %v548 = vpop.permute.xlu0 %547
        %551 = vset.pattern.permute.xlu0 0
        %552 = vperm.xlu0 %551, %v513
        %v553 = vpop.permute.xlu0 %552
        %556 = vset.pattern.permute.xlu0 0
        %557 = vperm.xlu0 %556, %v514
        %v558 = vpop.permute.xlu0 %557
        %561 = vset.pattern.permute.xlu0 0
        %562 = vperm.xlu0 %561, %v515
        %v563 = vpop.permute.xlu0 %562
        %566 = vset.pattern.permute.xlu0 0
        %567 = vperm.xlu0 %566, %v516
        %v568 = vpop.permute.xlu0 %567
        %571 = vset.pattern.permute.xlu0 0
        %572 = vperm.xlu0 %571, %v517
        %v573 = vpop.permute.xlu0 %572
        %576 = vset.pattern.permute.xlu0 0
        %577 = vperm.xlu0 %576, %v518
        %v578 = vpop.permute.xlu0 %577
        %581 = vset.pattern.permute.xlu0 0
        %582 = vperm.xlu0 %581, %v519
        %v583 = vpop.permute.xlu0 %582
        %586 = vset.pattern.permute.xlu0 0
        %587 = vperm.xlu0 %586, %v520
        %v588 = vpop.permute.xlu0 %587
        %591 = vset.pattern.permute.xlu0 0
        %592 = vperm.xlu0 %591, %v521
        %v593 = vpop.permute.xlu0 %592
        %596 = vset.pattern.permute.xlu0 0
        %597 = vperm.xlu0 %596, %v522
        %v598 = vpop.permute.xlu0 %597
        %601 = vset.pattern.permute.xlu0 0
        %602 = vperm.xlu0 %601, %v523
        %v603 = vpop.permute.xlu0 %602
        %v606 = vperm.slane %v524, 0
        %v608 = vadd.f32 %v528, %v606
        %v609 = vadd.f32 %v533, %v606
        %v610 = vadd.f32 %v538, %v606
        %v611 = vadd.f32 %v543, %v606
        %v612 = vadd.f32 %v548, %v606
        %v613 = vadd.f32 %v553, %v606
        %v614 = vadd.f32 %v558, %v606
        %v615 = vadd.f32 %v563, %v606
        %v616 = vadd.f32 %v568, %v606
        %v617 = vadd.f32 %v573, %v606
        %v618 = vadd.f32 %v578, %v606
        %v619 = vadd.f32 %v583, %v606
        %v620 = vadd.f32 %v588, %v606
        %v621 = vadd.f32 %v593, %v606
        %v622 = vadd.f32 %v598, %v606
        %v623 = vadd.f32 %v603, %v606
        %v624 = vld [vmem:[#allocation2] sm:$0x1]
        %v626 = vperm.slane %v624, 0
        %627 = vset.pattern.permute.xlu0 0
        %628 = vperm.xlu0 %627, %v626
        %v629 = vpop.permute.xlu0 %628
        %v631 = vadd.f32 %v608, %v629
        %v632 = vadd.f32 %v609, %v629
        %v633 = vadd.f32 %v610, %v629
        %v634 = vadd.f32 %v611, %v629
        %v635 = vadd.f32 %v612, %v629
        %v636 = vadd.f32 %v613, %v629
        %v637 = vadd.f32 %v614, %v629
        %v638 = vadd.f32 %v615, %v629
        %v639 = vadd.f32 %v616, %v629
        %v640 = vadd.f32 %v617, %v629
        %v641 = vadd.f32 %v618, %v629
        %v642 = vadd.f32 %v619, %v629
        %v643 = vadd.f32 %v620, %v629
        %v644 = vadd.f32 %v621, %v629
        %v645 = vadd.f32 %v622, %v629
        %v646 = vadd.f32 %v623, %v629
        %v647 = vpack.c.bf16 %v631, %v631
        %v648 = vpack.c.bf16 %v632, %v632
        %v649 = vpack.c.bf16 %v633, %v633
        %v650 = vpack.c.bf16 %v634, %v634
        %v651 = vpack.c.bf16 %v635, %v635
        %v652 = vpack.c.bf16 %v636, %v636
        %v653 = vpack.c.bf16 %v637, %v637
        %v654 = vpack.c.bf16 %v638, %v638
        %v655 = vpack.c.bf16 %v639, %v639
        %v656 = vpack.c.bf16 %v640, %v640
        %v657 = vpack.c.bf16 %v641, %v641
        %v658 = vpack.c.bf16 %v642, %v642
        %v659 = vpack.c.bf16 %v643, %v643
        %v660 = vpack.c.bf16 %v644, %v644
        %v661 = vpack.c.bf16 %v645, %v645
        %v662 = vpack.c.bf16 %v646, %v646
        %v663 = vunpack.c.l.bf16 %v647
        %v664 = vunpack.c.l.bf16 %v648
        %v665 = vunpack.c.l.bf16 %v649
        %v666 = vunpack.c.l.bf16 %v650
        %v667 = vunpack.c.l.bf16 %v651
        %v668 = vunpack.c.l.bf16 %v652
        %v669 = vunpack.c.l.bf16 %v653
        %v670 = vunpack.c.l.bf16 %v654
        %v671 = vunpack.c.l.bf16 %v655
        %v672 = vunpack.c.l.bf16 %v656
        %v673 = vunpack.c.l.bf16 %v657
        %v674 = vunpack.c.l.bf16 %v658
        %v675 = vunpack.c.l.bf16 %v659
        %v676 = vunpack.c.l.bf16 %v660
        %v677 = vunpack.c.l.bf16 %v661
        %v678 = vunpack.c.l.bf16 %v662
        %v679 = vtanh.pop %v663
        %v680 = vtanh.pop %v664
        %v681 = vtanh.pop %v665
        %v682 = vtanh.pop %v666
        %v683 = vtanh.pop %v667
        %v684 = vtanh.pop %v668
        %v685 = vtanh.pop %v669
        %v686 = vtanh.pop %v670
        %v687 = vtanh.pop %v671
        %v688 = vtanh.pop %v672
        %v689 = vtanh.pop %v673
        %v690 = vtanh.pop %v674
        %v691 = vtanh.pop %v675
        %v692 = vtanh.pop %v676
        %v693 = vtanh.pop %v677
        %v694 = vtanh.pop %v678
        %v695 = vpack.c.bf16 %v679, %v679
        %v696 = vpack.c.bf16 %v680, %v680
        %v697 = vpack.c.bf16 %v681, %v681
        %v698 = vpack.c.bf16 %v682, %v682
        %v699 = vpack.c.bf16 %v683, %v683
        %v700 = vpack.c.bf16 %v684, %v684
        %v701 = vpack.c.bf16 %v685, %v685
        %v702 = vpack.c.bf16 %v686, %v686
        %v703 = vpack.c.bf16 %v687, %v687
        %v704 = vpack.c.bf16 %v688, %v688
        %v705 = vpack.c.bf16 %v689, %v689
        %v706 = vpack.c.bf16 %v690, %v690
        %v707 = vpack.c.bf16 %v691, %v691
        %v708 = vpack.c.bf16 %v692, %v692
        %v709 = vpack.c.bf16 %v693, %v693
        %v710 = vpack.c.bf16 %v694, %v694
        %v711 = vld [vmem:[%s383] sm:$0xf]
        %v712 = vld [vmem:[%s383 + $0x4] sm:$0xf]
        %v713 = vld [vmem:[%s383 + $0x8] sm:$0xf]
        %v714 = vld [vmem:[%s383 + $0xc] sm:$0xf]
        %v715 = vld [vmem:[%s383 + $0x10] sm:$0xf]
        %v716 = vld [vmem:[%s383 + $0x14] sm:$0xf]
        %v717 = vld [vmem:[%s383 + $0x18] sm:$0xf]
        %v718 = vld [vmem:[%s383 + $0x1c] sm:$0xf]
        %v719 = vld [vmem:[%s383 + $0x20] sm:$0xf]
        %v720 = vld [vmem:[%s383 + $0x24] sm:$0xf]
        %v721 = vld [vmem:[%s383 + $0x28] sm:$0xf]
        %v722 = vld [vmem:[%s383 + $0x2c] sm:$0xf]
        %v723 = vld [vmem:[%s383 + $0x30] sm:$0xf]
        %v724 = vld [vmem:[%s383 + $0x34] sm:$0xf]
        %v725 = vld [vmem:[%s383 + $0x38] sm:$0xf]
        %v726 = vld [vmem:[%s383 + $0x3c] sm:$0xf]
        %v727 = vunpack.c.l.bf16 %v711
        %v728 = vunpack.c.l.bf16 %v712
        %v729 = vunpack.c.l.bf16 %v713
        %v730 = vunpack.c.l.bf16 %v714
        %v731 = vunpack.c.l.bf16 %v715
        %v732 = vunpack.c.l.bf16 %v716
        %v733 = vunpack.c.l.bf16 %v717
        %v734 = vunpack.c.l.bf16 %v718
        %v735 = vunpack.c.l.bf16 %v719
        %v736 = vunpack.c.l.bf16 %v720
        %v737 = vunpack.c.l.bf16 %v721
        %v738 = vunpack.c.l.bf16 %v722
        %v739 = vunpack.c.l.bf16 %v723
        %v740 = vunpack.c.l.bf16 %v724
        %v741 = vunpack.c.l.bf16 %v725
        %v742 = vunpack.c.l.bf16 %v726
        %v743 = vunpack.c.l.bf16 %v695
        %v744 = vunpack.c.l.bf16 %v696
        %v745 = vunpack.c.l.bf16 %v697
        %v746 = vunpack.c.l.bf16 %v698
        %v747 = vunpack.c.l.bf16 %v699
        %v748 = vunpack.c.l.bf16 %v700
        %v749 = vunpack.c.l.bf16 %v701
        %v750 = vunpack.c.l.bf16 %v702
        %v751 = vunpack.c.l.bf16 %v703
        %v752 = vunpack.c.l.bf16 %v704
        %v753 = vunpack.c.l.bf16 %v705
        %v754 = vunpack.c.l.bf16 %v706
        %v755 = vunpack.c.l.bf16 %v707
        %v756 = vunpack.c.l.bf16 %v708
        %v757 = vunpack.c.l.bf16 %v709
        %v758 = vunpack.c.l.bf16 %v710
        %v759 = vmul.f32 %v727, %v743
        %v760 = vmul.f32 %v728, %v744
        %v761 = vmul.f32 %v729, %v745
        %v762 = vmul.f32 %v730, %v746
        %v763 = vmul.f32 %v731, %v747
        %v764 = vmul.f32 %v732, %v748
        %v765 = vmul.f32 %v733, %v749
        %v766 = vmul.f32 %v734, %v750
        %v767 = vmul.f32 %v735, %v751
        %v768 = vmul.f32 %v736, %v752
        %v769 = vmul.f32 %v737, %v753
        %v770 = vmul.f32 %v738, %v754
        %v771 = vmul.f32 %v739, %v755
        %v772 = vmul.f32 %v740, %v756
        %v773 = vmul.f32 %v741, %v757
        %v774 = vmul.f32 %v742, %v758
        %v775 = vpack.c.bf16 %v760, %v759
        %v776 = vpack.c.bf16 %v762, %v761
        %v777 = vpack.c.bf16 %v764, %v763
        %v778 = vpack.c.bf16 %v766, %v765
        %v779 = vpack.c.bf16 %v768, %v767
        %v780 = vpack.c.bf16 %v770, %v769
        %v781 = vpack.c.bf16 %v772, %v771
        %v782 = vpack.c.bf16 %v774, %v773
        %v783 = vld [vmem:[%s454] sm:$0xff]
        %v784 = vld [vmem:[%s454 + $0x8] sm:$0xff]
        %v785 = vld [vmem:[%s454 + $0x10] sm:$0xff]
        %v786 = vld [vmem:[%s454 + $0x18] sm:$0xff]
        %v787 = vld [vmem:[%s454 + $0x20] sm:$0xff]
        %v788 = vld [vmem:[%s454 + $0x28] sm:$0xff]
        %v789 = vld [vmem:[%s454 + $0x30] sm:$0xff]
        %v790 = vld [vmem:[%s454 + $0x38] sm:$0xff]
        %v791 = vld [vmem:[%s454 + $0x40] sm:$0xff]
        %v792 = vld [vmem:[%s454 + $0x48] sm:$0xff]
        %v793 = vld [vmem:[%s454 + $0x50] sm:$0xff]
        %v794 = vld [vmem:[%s454 + $0x58] sm:$0xff]
        %v795 = vld [vmem:[%s454 + $0x60] sm:$0xff]
        %v796 = vld [vmem:[%s454 + $0x68] sm:$0xff]
        %v797 = vld [vmem:[%s454 + $0x70] sm:$0xff]
        %v798 = vld [vmem:[%s454 + $0x78] sm:$0xff]
        %v799 = vld [vmem:[%s433] sm:$0xf]
        %v800 = vld [vmem:[%s433 + $0x4] sm:$0xf]
        %v801 = vld [vmem:[%s433 + $0x8] sm:$0xf]
        %v802 = vld [vmem:[%s433 + $0xc] sm:$0xf]
        %v803 = vld [vmem:[%s433 + $0x10] sm:$0xf]
        %v804 = vld [vmem:[%s433 + $0x14] sm:$0xf]
        %v805 = vld [vmem:[%s433 + $0x18] sm:$0xf]
        %v806 = vld [vmem:[%s433 + $0x1c] sm:$0xf]
        %v807 = vld [vmem:[%s433 + $0x20] sm:$0xf]
        %v808 = vld [vmem:[%s433 + $0x24] sm:$0xf]
        %v809 = vld [vmem:[%s433 + $0x28] sm:$0xf]
        %v810 = vld [vmem:[%s433 + $0x2c] sm:$0xf]
        %v811 = vld [vmem:[%s433 + $0x30] sm:$0xf]
        %v812 = vld [vmem:[%s433 + $0x34] sm:$0xf]
        %v813 = vld [vmem:[%s433 + $0x38] sm:$0xf]
        %v814 = vld [vmem:[%s433 + $0x3c] sm:$0xf]
        %v831 = vunpack.c.l.b16 %v799
        %v832 = vunpack.c.l.b16 %v800
        %v833 = vunpack.c.l.b16 %v801
        %v834 = vunpack.c.l.b16 %v802
        %v835 = vunpack.c.l.b16 %v803
        %v836 = vunpack.c.l.b16 %v804
        %v837 = vunpack.c.l.b16 %v805
        %v838 = vunpack.c.l.b16 %v806
        %v839 = vunpack.c.l.b16 %v807
        %v840 = vunpack.c.l.b16 %v808
        %v841 = vunpack.c.l.b16 %v809
        %v842 = vunpack.c.l.b16 %v810
        %v843 = vunpack.c.l.b16 %v811
        %v844 = vunpack.c.l.b16 %v812
        %v845 = vunpack.c.l.b16 %v813
        %v846 = vunpack.c.l.b16 %v814
        %v847 = vpack.c.b16 %v832, %v831
        %v848 = vpack.c.b16 %v834, %v833
        %v849 = vpack.c.b16 %v836, %v835
        %v850 = vpack.c.b16 %v838, %v837
        %v851 = vpack.c.b16 %v840, %v839
        %v852 = vpack.c.b16 %v842, %v841
        %v853 = vpack.c.b16 %v844, %v843
        %v854 = vpack.c.b16 %v846, %v845
        %863 = vmatpush.bf16.msra.mxu0 %v854
        %864 = vmatpush.bf16.msra.mxu0 %v853
        %865 = vmatpush.bf16.msra.mxu0 %v852
        %866 = vmatpush.bf16.msra.mxu0 %v851
        %867 = vmatpush.bf16.msra.mxu0 %v850
        %868 = vmatpush.bf16.msra.mxu0 %v849
        %869 = vmatpush.bf16.msra.mxu0 %v848
        %870 = vmatpush.bf16.msra.mxu0 %v847
        %871 = vmatmul.bf16.gmra.mxu0 %v775
        %v872 = vpop.f32.mrf.mxu0
        %v873 = vadd.f32 0.0, %v872
        %v874 = vpop.f32.mrf.mxu0
        %v875 = vadd.f32 0.0, %v874
        %876 = vmatmul.bf16.gmra.mxu0 %v776
        %v877 = vpop.f32.mrf.mxu0
        %v878 = vadd.f32 0.0, %v877
        %v879 = vpop.f32.mrf.mxu0
        %v880 = vadd.f32 0.0, %v879
        %881 = vmatmul.bf16.gmra.mxu0 %v777
        %v882 = vpop.f32.mrf.mxu0
        %v883 = vadd.f32 0.0, %v882
        %v884 = vpop.f32.mrf.mxu0
        %v885 = vadd.f32 0.0, %v884
        %886 = vmatmul.bf16.gmra.mxu0 %v778
        %v887 = vpop.f32.mrf.mxu0
        %v888 = vadd.f32 0.0, %v887
        %v889 = vpop.f32.mrf.mxu0
        %v890 = vadd.f32 0.0, %v889
        %891 = vmatmul.bf16.gmra.mxu0 %v779
        %v892 = vpop.f32.mrf.mxu0
        %v893 = vadd.f32 0.0, %v892
        %v894 = vpop.f32.mrf.mxu0
        %v895 = vadd.f32 0.0, %v894
        %896 = vmatmul.bf16.gmra.mxu0 %v780
        %v897 = vpop.f32.mrf.mxu0
        %v898 = vadd.f32 0.0, %v897
        %v899 = vpop.f32.mrf.mxu0
        %v900 = vadd.f32 0.0, %v899
        %901 = vmatmul.bf16.gmra.mxu0 %v781
        %v902 = vpop.f32.mrf.mxu0
        %v903 = vadd.f32 0.0, %v902
        %v904 = vpop.f32.mrf.mxu0
        %v905 = vadd.f32 0.0, %v904
        %906 = vmatmul.bf16.gmra.mxu0 %v782
        %v907 = vpop.f32.mrf.mxu0
        %v908 = vadd.f32 0.0, %v907
        %v909 = vpop.f32.mrf.mxu0
        %v910 = vadd.f32 0.0, %v909
        %911 = vdwg.mxu0
        %v912 = vadd.f32 %v783, %v873
        %v913 = vadd.f32 %v784, %v875
        %v914 = vadd.f32 %v785, %v878
        %v915 = vadd.f32 %v786, %v880
        %v916 = vadd.f32 %v787, %v883
        %v917 = vadd.f32 %v788, %v885
        %v918 = vadd.f32 %v789, %v888
        %v919 = vadd.f32 %v790, %v890
        %v920 = vadd.f32 %v791, %v893
        %v921 = vadd.f32 %v792, %v895
        %v922 = vadd.f32 %v793, %v898
        %v923 = vadd.f32 %v794, %v900
        %v924 = vadd.f32 %v795, %v903
        %v925 = vadd.f32 %v796, %v905
        %v926 = vadd.f32 %v797, %v908
        %v927 = vadd.f32 %v798, %v910
        %928 = vst [vmem:[%s454] sm:$0xff] %v912
        %929 = vst [vmem:[%s454 + $0x8] sm:$0xff] %v913
        %930 = vst [vmem:[%s454 + $0x10] sm:$0xff] %v914
        %931 = vst [vmem:[%s454 + $0x18] sm:$0xff] %v915
        %932 = vst [vmem:[%s454 + $0x20] sm:$0xff] %v916
        %933 = vst [vmem:[%s454 + $0x28] sm:$0xff] %v917
        %934 = vst [vmem:[%s454 + $0x30] sm:$0xff] %v918
        %935 = vst [vmem:[%s454 + $0x38] sm:$0xff] %v919
        %936 = vst [vmem:[%s454 + $0x40] sm:$0xff] %v920
        %937 = vst [vmem:[%s454 + $0x48] sm:$0xff] %v921
        %938 = vst [vmem:[%s454 + $0x50] sm:$0xff] %v922
        %939 = vst [vmem:[%s454 + $0x58] sm:$0xff] %v923
        %940 = vst [vmem:[%s454 + $0x60] sm:$0xff] %v924
        %941 = vst [vmem:[%s454 + $0x68] sm:$0xff] %v925
        %942 = vst [vmem:[%s454 + $0x70] sm:$0xff] %v926
        %943 = vst [vmem:[%s454 + $0x78] sm:$0xff] %v927
        %s944 = smul.u32 16, %s23
        %p945 = scmp.lt.s32.totalorder %s944, 31
        %s946 = scalar_select %p945, %s944, 31
        %s947 = smul.addr %s946, 8
        %s948 = scalar_lea.vmem %s6, %s947
        // Predicated region
        $region90: #{fagcn_forward.5} parent=80 // pred_check
          %p949 = pneg %p202
        $region91: #{fagcn_forward.5} parent=80 // pred_check_branch
          %951 = sbr.rel (%p949) target = $region93
        $region92: #{fagcn_forward.5} parent=80 // pred_region
          %s952 = smul.u32 16, %s23
        $region93: #{fagcn_forward.5} parent=80 // pred_fallthru
          _
      $region81: #{fagcn_forward.5} parent=5 // pred_fallthru
        _
      %p953 = scmp.le.s32.totalorder 2, %s14
      // Predicated region
      $region94: #{fagcn_forward.5} parent=5 // pred_check
        %p954 = pneg %p953
      $region95: #{fagcn_forward.5} parent=5 // pred_check_branch
        %956 = sbr.rel (%p954) target = $region97
      $region96: #{fagcn_forward.5} parent=5 // pred_region
        %s957 = ssub.s32 %s14, 2
        // Predicated region
        $region98: #{fagcn_forward.5} parent=96 // pred_check
          %p958 = pneg %p208
        $region99: #{fagcn_forward.5} parent=96 // pred_check_branch
          %960 = sbr.rel (%p958) target = $region101
        $region100: #{fagcn_forward.5} parent=96 // pred_region
          %s961 = smul.u32 16, %s25
          %p962 = scmp.lt.s32.totalorder %s961, 31
          %s963 = scalar_select %p962, %s961, 31
          %s964 = smul.addr %s963, 8
          %s965 = scalar_lea.vmem %s6, %s964
        $region101: #{fagcn_forward.5} parent=96 // pred_fallthru
          _
      $region97: #{fagcn_forward.5} parent=5 // pred_fallthru
        _
    $region6: #{fagcn_forward.5} parent=1 // loop_footer
      %s18 = sadd.s32 1, %s14
    $region7: #{fagcn_forward.5} parent=1 // loop_footer_branch
      %13 = sbr.rel target = $region3
    $region8: #{fagcn_forward.5} parent=1 // loop_exit
      _

// kernel: fagcn_forward.7
$region0: #{fagcn_forward.7}
  #allocation0 [shape = 'u32[]', space=smem, size = 0x4, offset = 0x4, fixed_abs, tag = 'smem constant byte address 0x4 - core index']
  #allocation1 [shape = 'u32[72,128]{1,0:T(1,128)}', space=vmem, size = 0x9000, scoped, tag = 'internal scratch']
  %s0 = inlined_call_operand.vmem [shape: bf16[256,128], index: 0, kind: input, shape index: {}]
  %s1 = inlined_call_operand.vmem [shape: bf16[128,128], index: 1, kind: input, shape index: {}]
  %s2 = inlined_call_operand.vmem [shape: f32[1,128], index: 2, kind: input, shape index: {}]
  %s3 = inlined_call_operand.vmem [shape: f32[256,128], index: 3, kind: output, shape index: {}]
  %s4 = sld [smem:[#allocation0]]
  $region45: #{fagcn_forward.7} parent=0
    _
  %s6 = ssub.s32 1, %s4
  %s7 = scalar_select 0, %s6, %s4
  loop: start=0, step=1, limit=4
  $region2: #{fagcn_forward.7} parent=0 // loop_pre_header
    _
  $region3: #{fagcn_forward.7} parent=0 // loop_header
    %s9 = sphi 0, %s13
    %p10 = scmp.ge.s32.totalorder %s9, 4
    %s19 = sphi 0, %s21
    %s22 = sphi 0, %s19
    %s23 = sphi 0, %s22
    %s39 = sphi 0, %s23
    %s43 = sphi 0, %s43
    %s45 = sphi 0, %s43
    %s46 = sphi 0, %s45
    %s60 = sphi 0, %s46
    %s64 = sphi 0, %s64
    %s66 = sphi 0, %s64
    %s67 = sphi 0, %s66
    %s81 = sphi 0, %s67
    %s87 = sphi 0, %s89
    %s90 = sphi 0, %s87
    %s91 = sphi 0, %s90
    %s107 = sphi 0, %s91
  $region4: #{fagcn_forward.7} parent=0 // loop_header_branch
    %12 = sbr.rel (%p10) target = $region8
  $region5: #{fagcn_forward.7} parent=0 // loop_body
    %s14 = ssub.s32 %s9, 1
    %s15 = ssub.s32 %s9, 2
    %s16 = sadd.s32 %s9, 1
    %s17 = ssub.s32 %s9, %s16
    %p18 = scmp.eq.s32.totalorder %s17, 0
    %s20 = sadd.s32 %s19, 1
    %s21 = scalar_select %p18, %s19, %s20
    %p24 = pneg %p18
    %p25 = scmp.eq.s32.totalorder %s9, 1
    %p26 = por %p24, %p25
    %p27 = scmp.ne.s32.totalorder %s19, %s22
    %p28 = scmp.eq.s32.totalorder %s9, 0
    %p29 = por %p27, %p28
    %p30 = scmp.ne.s32.totalorder %s19, %s22
    %p31 = scmp.eq.s32.totalorder %s14, 1
    %p32 = por %p30, %p31
    %p33 = scmp.ne.s32.totalorder %s22, %s23
    %p34 = scmp.eq.s32.totalorder %s14, 0
    %p35 = por %p33, %p34
    %p36 = scmp.ne.s32.totalorder %s22, %s23
    %p37 = scmp.eq.s32.totalorder %s15, 1
    %p38 = por %p36, %p37
    %p40 = scmp.ne.s32.totalorder %s23, %s39
    %p41 = scmp.eq.s32.totalorder %s15, 0
    %p42 = por %p40, %p41
    %s44 = sadd.s32 %s43, 1
    %p47 = scmp.eq.s32.totalorder %s9, 1
    %p48 = scmp.ne.s32.totalorder %s43, %s45
    %p49 = scmp.eq.s32.totalorder %s9, 0
    %p50 = por %p48, %p49
    %p51 = scmp.ne.s32.totalorder %s43, %s45
    %p52 = scmp.eq.s32.totalorder %s14, 1
    %p53 = por %p51, %p52
    %p54 = scmp.ne.s32.totalorder %s45, %s46
    %p55 = scmp.eq.s32.totalorder %s14, 0
    %p56 = por %p54, %p55
    %p57 = scmp.ne.s32.totalorder %s45, %s46
    %p58 = scmp.eq.s32.totalorder %s15, 1
    %p59 = por %p57, %p58
    %p61 = scmp.ne.s32.totalorder %s46, %s60
    %p62 = scmp.eq.s32.totalorder %s15, 0
    %p63 = por %p61, %p62
    %s65 = sadd.s32 %s64, 1
    %p68 = scmp.eq.s32.totalorder %s9, 1
    %p69 = scmp.ne.s32.totalorder %s64, %s66
    %p70 = scmp.eq.s32.totalorder %s9, 0
    %p71 = por %p69, %p70
    %p72 = scmp.ne.s32.totalorder %s64, %s66
    %p73 = scmp.eq.s32.totalorder %s14, 1
    %p74 = por %p72, %p73
    %p75 = scmp.ne.s32.totalorder %s66, %s67
    %p76 = scmp.eq.s32.totalorder %s14, 0
    %p77 = por %p75, %p76
    %p78 = scmp.ne.s32.totalorder %s66, %s67
    %p79 = scmp.eq.s32.totalorder %s15, 1
    %p80 = por %p78, %p79
    %p82 = scmp.ne.s32.totalorder %s67, %s81
    %p83 = scmp.eq.s32.totalorder %s15, 0
    %p84 = por %p82, %p83
    %s85 = ssub.s32 %s9, %s16
    %p86 = scmp.eq.s32.totalorder %s85, 0
    %s88 = sadd.s32 %s87, 1
    %s89 = scalar_select %p86, %s87, %s88
    %p92 = pneg %p86
    %p93 = scmp.eq.s32.totalorder %s9, 1
    %p94 = por %p92, %p93
    %p95 = scmp.ne.s32.totalorder %s87, %s90
    %p96 = scmp.eq.s32.totalorder %s9, 0
    %p97 = por %p95, %p96
    %p98 = scmp.ne.s32.totalorder %s87, %s90
    %p99 = scmp.eq.s32.totalorder %s14, 1
    %p100 = por %p98, %p99
    %p101 = scmp.ne.s32.totalorder %s90, %s91
    %p102 = scmp.eq.s32.totalorder %s14, 0
    %p103 = por %p101, %p102
    %p104 = scmp.ne.s32.totalorder %s90, %s91
    %p105 = scmp.eq.s32.totalorder %s15, 1
    %p106 = por %p104, %p105
    %p108 = scmp.ne.s32.totalorder %s91, %s107
    %p109 = scmp.eq.s32.totalorder %s15, 0
    %p110 = por %p108, %p109
    %p111 = scmp.le.s32.totalorder 1, %s9
    %p112 = scmp.lt.s32.totalorder %s9, 3
    %p113 = pnand %p111, %p112
    %p114 = pneg %p113
    // Predicated region
    $region9: #{fagcn_forward.7} parent=5 // pred_check
      _
    $region10: #{fagcn_forward.7} parent=5 // pred_check_branch
      %116 = sbr.rel (%p113) target = $region12
    $region11: #{fagcn_forward.7} parent=5 // pred_region
      %s117 = ssub.s32 %s9, 1
      // Predicated region
      $region13: #{fagcn_forward.7} parent=11 // pred_check
        %p118 = pneg %p56
      $region14: #{fagcn_forward.7} parent=11 // pred_check_branch
        %120 = sbr.rel (%p118) target = $region16
      $region15: #{fagcn_forward.7} parent=11 // pred_region
        _
      $region16: #{fagcn_forward.7} parent=11 // pred_fallthru
        _
      // Predicated region
      $region17: #{fagcn_forward.7} parent=11 // pred_check
        %p121 = pneg %p77
      $region18: #{fagcn_forward.7} parent=11 // pred_check_branch
        %123 = sbr.rel (%p121) target = $region20
      $region19: #{fagcn_forward.7} parent=11 // pred_region
        _
      $region20: #{fagcn_forward.7} parent=11 // pred_fallthru
        _
    $region12: #{fagcn_forward.7} parent=5 // pred_fallthru
      _
    %p124 = scmp.lt.s32.totalorder %s9, 2
    // Predicated region
    $region21: #{fagcn_forward.7} parent=5 // pred_check
      %p125 = pneg %p124
    $region22: #{fagcn_forward.7} parent=5 // pred_check_branch
      %127 = sbr.rel (%p125) target = $region24
    $region23: #{fagcn_forward.7} parent=5 // pred_region
      // Predicated region
      $region25: #{fagcn_forward.7} parent=23 // pred_check
        %p128 = pneg %p29
      $region26: #{fagcn_forward.7} parent=23 // pred_check_branch
        %130 = sbr.rel (%p128) target = $region28
      $region27: #{fagcn_forward.7} parent=23 // pred_region
        %s131 = smul.u32 16, %s9
        %p132 = scmp.lt.s32.totalorder %s131, 31
        %s133 = scalar_select %p132, %s131, 31
        %s134 = smul.addr %s133, 4
        %s135 = scalar_lea.vmem %s0, %s134
        %s136 = smul.u32 16, %s9
      $region28: #{fagcn_forward.7} parent=23 // pred_fallthru
        _
    $region24: #{fagcn_forward.7} parent=5 // pred_fallthru
      _
    %p137 = scmp.le.s32.totalorder 1, %s9
    %p138 = scmp.lt.s32.totalorder %s9, 3
    %p139 = pnand %p137, %p138
    %p140 = pneg %p139
    // Predicated region
    $region29: #{fagcn_forward.7} parent=5 // pred_check
      _
    $region30: #{fagcn_forward.7} parent=5 // pred_check_branch
      %142 = sbr.rel (%p139) target = $region32
    $region31: #{fagcn_forward.7} parent=5 // pred_region
      %s143 = ssub.s32 %s9, 1
      %s144 = smul.u32 16, %s14
      %p145 = scmp.lt.s32.totalorder %s144, 31
      %s146 = scalar_select %p145, %s144, 31
      %s147 = smul.addr %s146, 4
      %s148 = scalar_lea.vmem %s0, %s147
      %p149 = pneg %p35
      %p150 = pneg %p32
      %p151 = pneg %p56
      %p152 = pneg %p53
      %p153 = pneg %p77
      %p154 = pneg %p74
      %p155 = pneg %p103
      %p156 = pneg %p100
      %s157 = smul.u32 16, %s14
      %p158 = scmp.lt.s32.totalorder %s157, 31
      %s159 = scalar_select %p158, %s157, 31
      %s160 = smul.addr %s159, 8
      %s161 = scalar_lea.vmem %s3, %s160
      %s162 = smul.u32 16, %s14
      %p163 = scmp.lt.s32.totalorder %s162, 31
      %s164 = scalar_select %p163, %s162, 31
      %s165 = smul.addr %s164, 4
      %s166 = scalar_lea.vmem %s0, %s165
      %s167 = smul.u32 16, %s14
      %s168 = smul.u32 16, %s14
      %p169 = scmp.lt.s32.totalorder %s168, 31
      %s170 = scalar_select %p169, %s168, 31
      %s171 = smul.addr %s170, 8
      %s172 = scalar_lea.vmem %s3, %s171
      %s173 = smul.u32 16, %s14
      %v174 = vld [vmem:[%s166] sm:$0xf]
      %v175 = vld [vmem:[%s166 + $0x4] sm:$0xf]
      %v176 = vld [vmem:[%s166 + $0x8] sm:$0xf]
      %v177 = vld [vmem:[%s166 + $0xc] sm:$0xf]
      %v178 = vld [vmem:[%s166 + $0x10] sm:$0xf]
      %v179 = vld [vmem:[%s166 + $0x14] sm:$0xf]
      %v180 = vld [vmem:[%s166 + $0x18] sm:$0xf]
      %v181 = vld [vmem:[%s166 + $0x1c] sm:$0xf]
      %v182 = vld [vmem:[%s166 + $0x20] sm:$0xf]
      %v183 = vld [vmem:[%s166 + $0x24] sm:$0xf]
      %v184 = vld [vmem:[%s166 + $0x28] sm:$0xf]
      %v185 = vld [vmem:[%s166 + $0x2c] sm:$0xf]
      %v186 = vld [vmem:[%s166 + $0x30] sm:$0xf]
      %v187 = vld [vmem:[%s166 + $0x34] sm:$0xf]
      %v188 = vld [vmem:[%s166 + $0x38] sm:$0xf]
      %v189 = vld [vmem:[%s166 + $0x3c] sm:$0xf]
      %v190 = vld [vmem:[%s1] sm:$0xf]
      %v191 = vld [vmem:[%s1 + $0x4] sm:$0xf]
      %v192 = vld [vmem:[%s1 + $0x8] sm:$0xf]
      %v193 = vld [vmem:[%s1 + $0xc] sm:$0xf]
      %v194 = vld [vmem:[%s1 + $0x10] sm:$0xf]
      %v195 = vld [vmem:[%s1 + $0x14] sm:$0xf]
      %v196 = vld [vmem:[%s1 + $0x18] sm:$0xf]
      %v197 = vld [vmem:[%s1 + $0x1c] sm:$0xf]
      %v198 = vld [vmem:[%s1 + $0x20] sm:$0xf]
      %v199 = vld [vmem:[%s1 + $0x24] sm:$0xf]
      %v200 = vld [vmem:[%s1 + $0x28] sm:$0xf]
      %v201 = vld [vmem:[%s1 + $0x2c] sm:$0xf]
      %v202 = vld [vmem:[%s1 + $0x30] sm:$0xf]
      %v203 = vld [vmem:[%s1 + $0x34] sm:$0xf]
      %v204 = vld [vmem:[%s1 + $0x38] sm:$0xf]
      %v205 = vld [vmem:[%s1 + $0x3c] sm:$0xf]
      %v206 = vld [vmem:[%s2] sm:$0x1]
      %v208 = vperm.slane %v206, 0
      %v226 = vunpack.c.l.b16 %v174
      %v227 = vunpack.c.l.b16 %v175
      %v228 = vunpack.c.l.b16 %v176
      %v229 = vunpack.c.l.b16 %v177
      %v230 = vunpack.c.l.b16 %v178
      %v231 = vunpack.c.l.b16 %v179
      %v232 = vunpack.c.l.b16 %v180
      %v233 = vunpack.c.l.b16 %v181
      %v234 = vunpack.c.l.b16 %v182
      %v235 = vunpack.c.l.b16 %v183
      %v236 = vunpack.c.l.b16 %v184
      %v237 = vunpack.c.l.b16 %v185
      %v238 = vunpack.c.l.b16 %v186
      %v239 = vunpack.c.l.b16 %v187
      %v240 = vunpack.c.l.b16 %v188
      %v241 = vunpack.c.l.b16 %v189
      %v242 = vpack.c.b16 %v227, %v226
      %v243 = vpack.c.b16 %v229, %v228
      %v244 = vpack.c.b16 %v231, %v230
      %v245 = vpack.c.b16 %v233, %v232
      %v246 = vpack.c.b16 %v235, %v234
      %v247 = vpack.c.b16 %v237, %v236
      %v248 = vpack.c.b16 %v239, %v238
      %v249 = vpack.c.b16 %v241, %v240
      %v274 = vunpack.c.l.b16 %v190
      %v275 = vunpack.c.l.b16 %v191
      %v276 = vunpack.c.l.b16 %v192
      %v277 = vunpack.c.l.b16 %v193
      %v278 = vunpack.c.l.b16 %v194
      %v279 = vunpack.c.l.b16 %v195
      %v280 = vunpack.c.l.b16 %v196
      %v281 = vunpack.c.l.b16 %v197
      %v282 = vunpack.c.l.b16 %v198
      %v283 = vunpack.c.l.b16 %v199
      %v284 = vunpack.c.l.b16 %v200
      %v285 = vunpack.c.l.b16 %v201
      %v286 = vunpack.c.l.b16 %v202
      %v287 = vunpack.c.l.b16 %v203
      %v288 = vunpack.c.l.b16 %v204
      %v289 = vunpack.c.l.b16 %v205
      %v290 = vpack.c.b16 %v275, %v274
      %v291 = vpack.c.b16 %v277, %v276
      %v292 = vpack.c.b16 %v279, %v278
      %v293 = vpack.c.b16 %v281, %v280
      %v294 = vpack.c.b16 %v283, %v282
      %v295 = vpack.c.b16 %v285, %v284
      %v296 = vpack.c.b16 %v287, %v286
      %v297 = vpack.c.b16 %v289, %v288
      %306 = vmatpush.bf16.msra.mxu0 %v297
      %307 = vmatpush.bf16.msra.mxu0 %v296
      %308 = vmatpush.bf16.msra.mxu0 %v295
      %309 = vmatpush.bf16.msra.mxu0 %v294
      %310 = vmatpush.bf16.msra.mxu0 %v293
      %311 = vmatpush.bf16.msra.mxu0 %v292
      %312 = vmatpush.bf16.msra.mxu0 %v291
      %313 = vmatpush.bf16.msra.mxu0 %v290
      %314 = vmatmul.bf16.gmra.mxu0 %v242
      %v315 = vpop.f32.mrf.mxu0
      %v316 = vadd.f32 %v208, %v315
      %v317 = vpop.f32.mrf.mxu0
      %v318 = vadd.f32 %v208, %v317
      %319 = vmatmul.bf16.gmra.mxu0 %v243
      %v320 = vpop.f32.mrf.mxu0
      %v321 = vadd.f32 %v208, %v320
      %v322 = vpop.f32.mrf.mxu0
      %v323 = vadd.f32 %v208, %v322
      %324 = vmatmul.bf16.gmra.mxu0 %v244
      %v325 = vpop.f32.mrf.mxu0
      %v326 = vadd.f32 %v208, %v325
      %v327 = vpop.f32.mrf.mxu0
      %v328 = vadd.f32 %v208, %v327
      %329 = vmatmul.bf16.gmra.mxu0 %v245
      %v330 = vpop.f32.mrf.mxu0
      %v331 = vadd.f32 %v208, %v330
      %v332 = vpop.f32.mrf.mxu0
      %v333 = vadd.f32 %v208, %v332
      %334 = vmatmul.bf16.gmra.mxu0 %v246
      %v335 = vpop.f32.mrf.mxu0
      %v336 = vadd.f32 %v208, %v335
      %v337 = vpop.f32.mrf.mxu0
      %v338 = vadd.f32 %v208, %v337
      %339 = vmatmul.bf16.gmra.mxu0 %v247
      %v340 = vpop.f32.mrf.mxu0
      %v341 = vadd.f32 %v208, %v340
      %v342 = vpop.f32.mrf.mxu0
      %v343 = vadd.f32 %v208, %v342
      %344 = vmatmul.bf16.gmra.mxu0 %v248
      %v345 = vpop.f32.mrf.mxu0
      %v346 = vadd.f32 %v208, %v345
      %v347 = vpop.f32.mrf.mxu0
      %v348 = vadd.f32 %v208, %v347
      %349 = vmatmul.bf16.gmra.mxu0 %v249
      %v350 = vpop.f32.mrf.mxu0
      %v351 = vadd.f32 %v208, %v350
      %v352 = vpop.f32.mrf.mxu0
      %v353 = vadd.f32 %v208, %v352
      %354 = vdwg.mxu0
      %v355 = vlaneseq
      %v356 = vand.u32 %v355, 127
      %vm357 = vcmp.lt.s32.totalorder %v356, 8
      %v358 = vsel %vm357, %v316, -1e+30
      %v359 = vsel %vm357, %v318, -1e+30
      %v360 = vsel %vm357, %v321, -1e+30
      %v361 = vsel %vm357, %v323, -1e+30
      %v362 = vsel %vm357, %v326, -1e+30
      %v363 = vsel %vm357, %v328, -1e+30
      %v364 = vsel %vm357, %v331, -1e+30
      %v365 = vsel %vm357, %v333, -1e+30
      %v366 = vsel %vm357, %v336, -1e+30
      %v367 = vsel %vm357, %v338, -1e+30
      %v368 = vsel %vm357, %v341, -1e+30
      %v369 = vsel %vm357, %v343, -1e+30
      %v370 = vsel %vm357, %v346, -1e+30
      %v371 = vsel %vm357, %v348, -1e+30
      %v372 = vsel %vm357, %v351, -1e+30
      %v373 = vsel %vm357, %v353, -1e+30
      %374 = vmax.xlane.f32.xlu0 %v358
      %v375 = vpop.xlane.xlu0 %374
      %376 = vmax.xlane.f32.xlu0 %v359
      %v377 = vpop.xlane.xlu0 %376
      %378 = vmax.xlane.f32.xlu0 %v360
      %v379 = vpop.xlane.xlu0 %378
      %380 = vmax.xlane.f32.xlu0 %v361
      %v381 = vpop.xlane.xlu0 %380
      %382 = vmax.xlane.f32.xlu0 %v362
      %v383 = vpop.xlane.xlu0 %382
      %384 = vmax.xlane.f32.xlu0 %v363
      %v385 = vpop.xlane.xlu0 %384
      %386 = vmax.xlane.f32.xlu0 %v364
      %v387 = vpop.xlane.xlu0 %386
      %388 = vmax.xlane.f32.xlu0 %v365
      %v389 = vpop.xlane.xlu0 %388
      %390 = vmax.xlane.f32.xlu0 %v366
      %v391 = vpop.xlane.xlu0 %390
      %392 = vmax.xlane.f32.xlu0 %v367
      %v393 = vpop.xlane.xlu0 %392
      %394 = vmax.xlane.f32.xlu0 %v368
      %v395 = vpop.xlane.xlu0 %394
      %396 = vmax.xlane.f32.xlu0 %v369
      %v397 = vpop.xlane.xlu0 %396
      %398 = vmax.xlane.f32.xlu0 %v370
      %v399 = vpop.xlane.xlu0 %398
      %400 = vmax.xlane.f32.xlu0 %v371
      %v401 = vpop.xlane.xlu0 %400
      %402 = vmax.xlane.f32.xlu0 %v372
      %v403 = vpop.xlane.xlu0 %402
      %404 = vmax.xlane.f32.xlu0 %v373
      %v405 = vpop.xlane.xlu0 %404
      %v406 = vsub.f32 %v358, %v375
      %v407 = vsub.f32 %v359, %v377
      %v408 = vsub.f32 %v360, %v379
      %v409 = vsub.f32 %v361, %v381
      %v410 = vsub.f32 %v362, %v383
      %v411 = vsub.f32 %v363, %v385
      %v412 = vsub.f32 %v364, %v387
      %v413 = vsub.f32 %v365, %v389
      %v414 = vsub.f32 %v366, %v391
      %v415 = vsub.f32 %v367, %v393
      %v416 = vsub.f32 %v368, %v395
      %v417 = vsub.f32 %v369, %v397
      %v418 = vsub.f32 %v370, %v399
      %v419 = vsub.f32 %v371, %v401
      %v420 = vsub.f32 %v372, %v403
      %v421 = vsub.f32 %v373, %v405
      %v422 = vmul.f32 %v406, 1.442695
      %v423 = vpow.pop %v422
      %v424 = vmul.f32 %v407, 1.442695
      %v425 = vpow.pop %v424
      %v426 = vmul.f32 %v408, 1.442695
      %v427 = vpow.pop %v426
      %v428 = vmul.f32 %v409, 1.442695
      %v429 = vpow.pop %v428
      %v430 = vmul.f32 %v410, 1.442695
      %v431 = vpow.pop %v430
      %v432 = vmul.f32 %v411, 1.442695
      %v433 = vpow.pop %v432
      %v434 = vmul.f32 %v412, 1.442695
      %v435 = vpow.pop %v434
      %v436 = vmul.f32 %v413, 1.442695
      %v437 = vpow.pop %v436
      %v438 = vmul.f32 %v414, 1.442695
      %v439 = vpow.pop %v438
      %v440 = vmul.f32 %v415, 1.442695
      %v441 = vpow.pop %v440
      %v442 = vmul.f32 %v416, 1.442695
      %v443 = vpow.pop %v442
      %v444 = vmul.f32 %v417, 1.442695
      %v445 = vpow.pop %v444
      %v446 = vmul.f32 %v418, 1.442695
      %v447 = vpow.pop %v446
      %v448 = vmul.f32 %v419, 1.442695
      %v449 = vpow.pop %v448
      %v450 = vmul.f32 %v420, 1.442695
      %v451 = vpow.pop %v450
      %v452 = vmul.f32 %v421, 1.442695
      %v453 = vpow.pop %v452
      %454 = vadd.xlane.f32.xlu0 %v423
      %v455 = vpop.xlane.xlu0 %454
      %456 = vadd.xlane.f32.xlu0 %v425
      %v457 = vpop.xlane.xlu0 %456
      %458 = vadd.xlane.f32.xlu0 %v427
      %v459 = vpop.xlane.xlu0 %458
      %460 = vadd.xlane.f32.xlu0 %v429
      %v461 = vpop.xlane.xlu0 %460
      %462 = vadd.xlane.f32.xlu0 %v431
      %v463 = vpop.xlane.xlu0 %462
      %464 = vadd.xlane.f32.xlu0 %v433
      %v465 = vpop.xlane.xlu0 %464
      %466 = vadd.xlane.f32.xlu0 %v435
      %v467 = vpop.xlane.xlu0 %466
      %468 = vadd.xlane.f32.xlu0 %v437
      %v469 = vpop.xlane.xlu0 %468
      %470 = vadd.xlane.f32.xlu0 %v439
      %v471 = vpop.xlane.xlu0 %470
      %472 = vadd.xlane.f32.xlu0 %v441
      %v473 = vpop.xlane.xlu0 %472
      %474 = vadd.xlane.f32.xlu0 %v443
      %v475 = vpop.xlane.xlu0 %474
      %476 = vadd.xlane.f32.xlu0 %v445
      %v477 = vpop.xlane.xlu0 %476
      %478 = vadd.xlane.f32.xlu0 %v447
      %v479 = vpop.xlane.xlu0 %478
      %480 = vadd.xlane.f32.xlu0 %v449
      %v481 = vpop.xlane.xlu0 %480
      %482 = vadd.xlane.f32.xlu0 %v451
      %v483 = vpop.xlane.xlu0 %482
      %484 = vadd.xlane.f32.xlu0 %v453
      %v485 = vpop.xlane.xlu0 %484
      %v486 = vlog2.pop %v455
      %v487 = vmul.f32 %v486, 0.6931472
      %v488 = vlog2.pop %v457
      %v489 = vmul.f32 %v488, 0.6931472
      %v490 = vlog2.pop %v459
      %v491 = vmul.f32 %v490, 0.6931472
      %v492 = vlog2.pop %v461
      %v493 = vmul.f32 %v492, 0.6931472
      %v494 = vlog2.pop %v463
      %v495 = vmul.f32 %v494, 0.6931472
      %v496 = vlog2.pop %v465
      %v497 = vmul.f32 %v496, 0.6931472
      %v498 = vlog2.pop %v467
      %v499 = vmul.f32 %v498, 0.6931472
      %v500 = vlog2.pop %v469
      %v501 = vmul.f32 %v500, 0.6931472
      %v502 = vlog2.pop %v471
      %v503 = vmul.f32 %v502, 0.6931472
      %v504 = vlog2.pop %v473
      %v505 = vmul.f32 %v504, 0.6931472
      %v506 = vlog2.pop %v475
      %v507 = vmul.f32 %v506, 0.6931472
      %v508 = vlog2.pop %v477
      %v509 = vmul.f32 %v508, 0.6931472
      %v510 = vlog2.pop %v479
      %v511 = vmul.f32 %v510, 0.6931472
      %v512 = vlog2.pop %v481
      %v513 = vmul.f32 %v512, 0.6931472
      %v514 = vlog2.pop %v483
      %v515 = vmul.f32 %v514, 0.6931472
      %v516 = vlog2.pop %v485
      %v517 = vmul.f32 %v516, 0.6931472
      %v518 = vadd.f32 %v487, %v375
      %v519 = vadd.f32 %v489, %v377
      %v520 = vadd.f32 %v491, %v379
      %v521 = vadd.f32 %v493, %v381
      %v522 = vadd.f32 %v495, %v383
      %v523 = vadd.f32 %v497, %v385
      %v524 = vadd.f32 %v499, %v387
      %v525 = vadd.f32 %v501, %v389
      %v526 = vadd.f32 %v503, %v391
      %v527 = vadd.f32 %v505, %v393
      %v528 = vadd.f32 %v507, %v395
      %v529 = vadd.f32 %v509, %v397
      %v530 = vadd.f32 %v511, %v399
      %v531 = vadd.f32 %v513, %v401
      %v532 = vadd.f32 %v515, %v403
      %v533 = vadd.f32 %v517, %v405
      %v534 = vsub.f32 %v358, %v518
      %v535 = vsub.f32 %v359, %v519
      %v536 = vsub.f32 %v360, %v520
      %v537 = vsub.f32 %v361, %v521
      %v538 = vsub.f32 %v362, %v522
      %v539 = vsub.f32 %v363, %v523
      %v540 = vsub.f32 %v364, %v524
      %v541 = vsub.f32 %v365, %v525
      %v542 = vsub.f32 %v366, %v526
      %v543 = vsub.f32 %v367, %v527
      %v544 = vsub.f32 %v368, %v528
      %v545 = vsub.f32 %v369, %v529
      %v546 = vsub.f32 %v370, %v530
      %v547 = vsub.f32 %v371, %v531
      %v548 = vsub.f32 %v372, %v532
      %v549 = vsub.f32 %v373, %v533
      %550 = vst [vmem:[%s172] sm:$0xff] %v534
      %551 = vst [vmem:[%s172 + $0x8] sm:$0xff] %v535
      %552 = vst [vmem:[%s172 + $0x10] sm:$0xff] %v536
      %553 = vst [vmem:[%s172 + $0x18] sm:$0xff] %v537
      %554 = vst [vmem:[%s172 + $0x20] sm:$0xff] %v538
      %555 = vst [vmem:[%s172 + $0x28] sm:$0xff] %v539
      %556 = vst [vmem:[%s172 + $0x30] sm:$0xff] %v540
      %557 = vst [vmem:[%s172 + $0x38] sm:$0xff] %v541
      %558 = vst [vmem:[%s172 + $0x40] sm:$0xff] %v542
      %559 = vst [vmem:[%s172 + $0x48] sm:$0xff] %v543
      %560 = vst [vmem:[%s172 + $0x50] sm:$0xff] %v544
      %561 = vst [vmem:[%s172 + $0x58] sm:$0xff] %v545
      %562 = vst [vmem:[%s172 + $0x60] sm:$0xff] %v546
      %563 = vst [vmem:[%s172 + $0x68] sm:$0xff] %v547
      %564 = vst [vmem:[%s172 + $0x70] sm:$0xff] %v548
      %565 = vst [vmem:[%s172 + $0x78] sm:$0xff] %v549
      %s566 = smul.u32 16, %s14
      %p567 = scmp.lt.s32.totalorder %s566, 31
      %s568 = scalar_select %p567, %s566, 31
      %s569 = smul.addr %s568, 8
      %s570 = scalar_lea.vmem %s3, %s569
      // Predicated region
      $region33: #{fagcn_forward.7} parent=31 // pred_check
        %p571 = pneg %p100
      $region34: #{fagcn_forward.7} parent=31 // pred_check_branch
        %573 = sbr.rel (%p571) target = $region36
      $region35: #{fagcn_forward.7} parent=31 // pred_region
        %s574 = smul.u32 16, %s14
      $region36: #{fagcn_forward.7} parent=31 // pred_fallthru
        _
    $region32: #{fagcn_forward.7} parent=5 // pred_fallthru
      _
    %p575 = scmp.le.s32.totalorder 2, %s9
    // Predicated region
    $region37: #{fagcn_forward.7} parent=5 // pred_check
      %p576 = pneg %p575
    $region38: #{fagcn_forward.7} parent=5 // pred_check_branch
      %578 = sbr.rel (%p576) target = $region40
    $region39: #{fagcn_forward.7} parent=5 // pred_region
      %s579 = ssub.s32 %s9, 2
      // Predicated region
      $region41: #{fagcn_forward.7} parent=39 // pred_check
        %p580 = pneg %p106
      $region42: #{fagcn_forward.7} parent=39 // pred_check_branch
        %582 = sbr.rel (%p580) target = $region44
      $region43: #{fagcn_forward.7} parent=39 // pred_region
        %s583 = smul.u32 16, %s15
        %p584 = scmp.lt.s32.totalorder %s583, 31
        %s585 = scalar_select %p584, %s583, 31
        %s586 = smul.addr %s585, 8
        %s587 = scalar_lea.vmem %s3, %s586
      $region44: #{fagcn_forward.7} parent=39 // pred_fallthru
        _
    $region40: #{fagcn_forward.7} parent=5 // pred_fallthru
      _
  $region6: #{fagcn_forward.7} parent=0 // loop_footer
    %s13 = sadd.s32 1, %s9
  $region7: #{fagcn_forward.7} parent=0 // loop_footer_branch
    %8 = sbr.rel target = $region3
  $region8: #{fagcn_forward.7} parent=0 // loop_exit
    _

</llo_original>
